<compile_context>
chip_gen: v7x
topology: tpu7x:2x2x1
jax: 0.10.0
libtpu: 0.0.40
codegen_flags: <defaults>
</compile_context>

<pallas_src>
import functools

import jax
import jax.numpy as jnp
from jax.experimental import pallas as pl
from jax.experimental.pallas import tpu as pltpu


def _round_up(x, m):
    return ((x + m - 1) // m) * m


def _pick_tm(K, M, cout, vmem_budget=6 * 1024 * 1024):
    """Largest lane-aligned M-tile that keeps double-buffered patch (bf16) and
    output (f32) tiles within `vmem_budget`.  Small M -> single full tile."""
    if M <= 128:
        return M
    per_m = 2 * (K * 2) + 2 * (cout * 4)          # 2 bufs patches + 2 bufs out
    tm = vmem_budget // max(per_m, 1)
    tm = max(128, min(2048, (tm // 128) * 128))
    tm = min(tm, _round_up(M, 128))               # never tile coarser than M
    return tm


# ----------------------------------------------------------------------------
# Pallas kernels
# ----------------------------------------------------------------------------
def conv_mm_kernel(w_ref, p_ref, b_ref, scale_ref, shift_ref, o_ref):
    """Fused conv-as-matmul (flipped: Cout x M_tile) + bias + LeakyReLU(0.2)
    + eval BatchNorm affine.  Dropout(0.2) -> identity in eval mode."""
    acc = jnp.dot(w_ref[...], p_ref[...], preferred_element_type=jnp.float32)
    acc = acc + b_ref[...]                        # bias, broadcast over lanes (M)
    acc = jnp.where(acc > 0, acc, 0.2 * acc)      # LeakyReLU(0.2)
    o_ref[...] = acc * scale_ref[...] + shift_ref[...]   # BatchNorm (eval affine)


# ----------------------------------------------------------------------------
# Pallas wrappers
# ----------------------------------------------------------------------------
def conv_mm(w_flat, patches, bias, scale, shift):
    """w_flat: (Cout, K) bf16; patches: (K, M) bf16; bias/scale/shift: (Cout, 1) f32.
    Returns (Cout, M) f32."""
    cout, K = w_flat.shape
    _, M = patches.shape

    tm = _pick_tm(K, M, cout)
    Mp = _round_up(M, tm)
    if Mp != M:
        patches = jnp.pad(patches, ((0, 0), (0, Mp - M)))
    grid = (Mp // tm,)

    flops = 2 * cout * K * Mp
    bytes_accessed = int(
        w_flat.size * w_flat.dtype.itemsize
        + Mp * K * patches.dtype.itemsize
        + cout * Mp * 4
        + 3 * cout * 4
    )

    out = pl.pallas_call(
        conv_mm_kernel,
        out_shape=jax.ShapeDtypeStruct((cout, Mp), jnp.float32),
        grid=grid,
        in_specs=[
            pl.BlockSpec((cout, K), lambda i: (0, 0)),        # weight, VMEM-resident
            pl.BlockSpec((K, tm), lambda i: (0, i)),          # patch tile over M
            pl.BlockSpec((cout, 1), lambda i: (0, 0)),        # bias
            pl.BlockSpec((cout, 1), lambda i: (0, 0)),        # BN scale
            pl.BlockSpec((cout, 1), lambda i: (0, 0)),        # BN shift
        ],
        out_specs=pl.BlockSpec((cout, tm), lambda i: (0, i)),
        compiler_params=pltpu.CompilerParams(
            dimension_semantics=("parallel",)),
        cost_estimate=pl.CostEstimate(
            flops=flops, transcendentals=0, bytes_accessed=bytes_accessed),
    )(w_flat, patches, bias, scale, shift)

    if Mp != M:
        out = out[:, :M]
    return out


def heads(x_flat, w_comb, b_comb, num_classes):
    """Fused discrim (Linear+Sigmoid) and aux (Linear+Softmax) heads.
    w_comb: (F, 256) with cols [0, NC) = aux, col 128 = discrim, rest zero."""
    B, F = x_flat.shape
    Cp = w_comb.shape[1]

    def kernel(x_ref, w_ref, b_ref, valid_ref, labels_ref):
        z = jnp.dot(x_ref[...], w_ref[...], preferred_element_type=jnp.float32)
        z = z + b_ref[...]
        # aux head: stable softmax over the first num_classes columns
        a = z[:, :num_classes]
        a = a - jnp.max(a, axis=-1, keepdims=True)
        e = jnp.exp(a)
        labels_ref[...] = e * pl.reciprocal(
            jnp.sum(e, axis=-1, keepdims=True), approx=False)
        # discrim head: numerically stable sigmoid on (tile-aligned) column 128
        d = z[:, 128:129]
        pos = 1.0 / (1.0 + jnp.exp(-jnp.abs(d)))
        valid_ref[...] = jnp.where(d >= 0, pos, 1.0 - pos)

    return pl.pallas_call(
        kernel,
        out_shape=(
            jax.ShapeDtypeStruct((B, 1), jnp.float32),
            jax.ShapeDtypeStruct((B, num_classes), jnp.float32),
        ),
        grid=(1,),
        in_specs=[
            pl.BlockSpec((B, F), lambda i: (0, 0)),
            pl.BlockSpec((F, Cp), lambda i: (0, 0)),
            pl.BlockSpec((1, Cp), lambda i: (0, 0)),
        ],
        out_specs=(
            pl.BlockSpec((B, 1), lambda i: (0, 0)),
            pl.BlockSpec((B, num_classes), lambda i: (0, 0)),
        ),
        cost_estimate=pl.CostEstimate(
            flops=2 * B * F * Cp,
            transcendentals=2 * B * (num_classes + 1),
            bytes_accessed=int((B * F + F * Cp) * 2 + Cp * 4
                               + B * (1 + num_classes) * 4),
        ),
    )(x_flat, w_comb, b_comb)


# ----------------------------------------------------------------------------
# Glue: im2col in CNHW layout, conv block, parameter setup, full forward
# ----------------------------------------------------------------------------
def im2col_cnhw(x_cnhw, k=4, s=2, p=1):
    """x: (C, N, H, W) -> patches (K = C*k*k, M = N*Ho*Wo).
    K ordering = (Cin, kh, kw), matching PyTorch Conv2d weight flattening.
    M ordering = (N, Ho, Wo), so the kernel output (Cout, M) reshapes directly
    to the next layer's (Cout, N, Ho, Wo) activation — no transposes needed."""
    C, N, H, W = x_cnhw.shape
    Ho = (H + 2 * p - k) // s + 1
    Wo = (W + 2 * p - k) // s + 1
    xp = jnp.pad(x_cnhw, ((0, 0), (0, 0), (p, p), (p, p)))
    idx_h = jnp.arange(Ho)[:, None] * s + jnp.arange(k)[None, :]   # (Ho, k)
    idx_w = jnp.arange(Wo)[:, None] * s + jnp.arange(k)[None, :]   # (Wo, k)
    # gather -> (C, N, Ho, kh, Wo, kw)
    patches = xp[:, :, idx_h[:, :, None, None], idx_w[None, None, :, :]]
    # -> (C, kh, kw, N, Ho, Wo)
    patches = patches.transpose(0, 3, 5, 1, 2, 4)
    return patches.reshape(C * k * k, N * Ho * Wo), Ho, Wo


def conv_block(x_cnhw, p):
    w, b, scale, shift = p["w"], p["b"], p["scale"], p["shift"]
    cout, cin, kh, kw = w.shape
    N = x_cnhw.shape[1]
    patches, Ho, Wo = im2col_cnhw(x_cnhw, k=kh)
    w_flat = w.reshape(cout, cin * kh * kw)                        # (Cout, K)
    out = conv_mm(
        w_flat.astype(jnp.bfloat16),
        patches.astype(jnp.bfloat16),
        b.reshape(cout, 1).astype(jnp.float32),
        scale.reshape(cout, 1).astype(jnp.float32),
        shift.reshape(cout, 1).astype(jnp.float32),
    )
    return out.reshape(cout, N, Ho, Wo)


def make_params(key, target_size=64, num_channels=3, num_classes=10,
                feature_size=16):
    assert target_size in (64, 128, 256)
    assert num_channels in (1, 3)
    assert feature_size // 8 > 0
    fs = feature_size // 2
    eps = 0.8

    def conv_p(k, cin, cout, with_bn):
        kw_, kb_ = jax.random.split(k)
        w = jax.random.normal(kw_, (cout, cin, 4, 4), jnp.float32) * 0.02
        b = jax.random.normal(kb_, (cout,), jnp.float32) * 0.02
        if with_bn:
            # eval-mode BN, default running stats: scale=1/sqrt(var+eps), shift=0
            scale = jnp.full((cout,), 1.0 / jnp.sqrt(1.0 + eps), jnp.float32)
        else:
            scale = jnp.ones((cout,), jnp.float32)
        shift = jnp.zeros((cout,), jnp.float32)
        return dict(w=w, b=b, scale=scale, shift=shift)

    keys = jax.random.split(key, 8)
    params = {}
    params["conv_1"] = conv_p(keys[0], num_channels, fs, with_bn=False)
    params["conv_2"] = conv_p(keys[1], fs, fs, with_bn=True)
    params["conv_3"] = conv_p(keys[2], fs, fs * 2, with_bn=True)
    fs *= 2
    if target_size >= 128:
        params["conv_4"] = conv_p(keys[3], fs, fs * 2, with_bn=True)
        fs *= 2
        if target_size == 256:
            params["conv_5"] = conv_p(keys[4], fs, fs * 2, with_bn=True)
            fs *= 2
    params["conv_final"] = conv_p(keys[5], fs, fs * 2, with_bn=True)
    fs *= 2
    flat = fs * 4 ** 2

    # Heads in PyTorch (out_features, in_features) layout, in_features ordered
    # (C, H, W) — matches the flatten order used in discriminator_forward.
    kdw, kdb, kaw, kab = jax.random.split(keys[6], 4)
    wd = jax.random.normal(kdw, (1, flat), jnp.float32) * 0.02
    bd = jax.random.normal(kdb, (1,), jnp.float32) * 0.02
    wa = jax.random.normal(kaw, (num_classes, flat), jnp.float32) * 0.02
    ba = jax.random.normal(kab, (num_classes,), jnp.float32) * 0.02

    # Fused head weight: columns [0, NC) = aux, column 128 = discrim, rest zero.
    w_comb = jnp.zeros((flat, 256), jnp.float32)
    w_comb = w_comb.at[:, :num_classes].set(wa.T)
    w_comb = w_comb.at[:, 128].set(wd[0])
    b_comb = jnp.zeros((1, 256), jnp.float32)
    b_comb = b_comb.at[0, :num_classes].set(ba)
    b_comb = b_comb.at[0, 128].set(bd[0])
    params["heads_w"] = w_comb
    params["heads_b"] = b_comb
    return params


@functools.partial(jax.jit, static_argnames=("target_size", "num_classes"))
def discriminator_forward(params, x_nchw, *, target_size, num_classes):
    # One-time layout change NCHW -> CNHW; everything downstream stays CNHW.
    x = jnp.transpose(x_nchw, (1, 0, 2, 3))
    x = conv_block(x, params["conv_1"])
    x = conv_block(x, params["conv_2"])
    x = conv_block(x, params["conv_3"])
    if target_size >= 128:
        x = conv_block(x, params["conv_4"])
        if target_size == 256:
            x = conv_block(x, params["conv_5"])
    x = conv_block(x, params["conv_final"])
    # PyTorch x.view(B, -1) flattens per-sample in (C, H, W) order.
    N = x.shape[1]
    flat = jnp.transpose(x, (1, 0, 2, 3)).reshape(N, -1)
    valid, labels = heads(flat.astype(jnp.bfloat16),
                          params["heads_w"].astype(jnp.bfloat16),
                          params["heads_b"], num_classes)
    return valid, labels


if __name__ == "__main__":
    key = jax.random.PRNGKey(0)
    kp, kx = jax.random.split(key)

    target_size = 64        # smallest allowed by the module's assert
    num_channels = 3
    num_classes = 10
    feature_size = 16       # small but valid (feature_size // 8 > 0)
    batch = 2

    params = make_params(kp, target_size, num_channels, num_classes, feature_size)
    x = jax.random.normal(kx, (batch, num_channels, target_size, target_size),
                          jnp.float32)

    valid, labels = discriminator_forward(
        params, x, target_size=target_size, num_classes=num_classes)
    jax.block_until_ready((valid, labels))

    assert valid.shape == (batch, 1)
    assert labels.shape == (batch, num_classes)
    assert bool(jnp.all(jnp.isfinite(valid))) and bool(jnp.all(jnp.isfinite(labels)))
    assert bool(jnp.all(valid >= 0.0)) and bool(jnp.all(valid <= 1.0))
    assert jnp.allclose(jnp.sum(labels, axis=1), 1.0, atol=1e-3)

    print("KERNEL_OK")
</pallas_src>

<mosaic_0001>
module attributes {stable_mosaic.version = 11 : i64} {
  func.func @conv_mm_kernel(%arg0: i32, %arg1: memref<8x48xbf16, #tpu.memory_space<vmem>>, %arg2: memref<48x2048xbf16, #tpu.memory_space<vmem>>, %arg3: memref<8x1xf32, #tpu.memory_space<vmem>>, %arg4: memref<8x1xf32, #tpu.memory_space<vmem>>, %arg5: memref<8x1xf32, #tpu.memory_space<vmem>>, %arg6: memref<8x2048xf32, #tpu.memory_space<vmem>>) attributes {dimension_semantics = [#tpu.dimension_semantics<parallel>], iteration_bounds = array<i64: 1>, scalar_prefetch = 0 : i64, scratch_operands = 0 : i64, tpu.core_type = #tpu.core_type<tc>, window_params = [{pipeline_mode = #tpu.pipeline_mode<synchronous>, transform_indices = @transform_0, window_bounds = array<i64: 8, 48>}, {transform_indices = @transform_1, window_bounds = array<i64: 48, 2048>}, {pipeline_mode = #tpu.pipeline_mode<synchronous>, transform_indices = @transform_2, window_bounds = array<i64: 8, 1>}, {pipeline_mode = #tpu.pipeline_mode<synchronous>, transform_indices = @transform_3, window_bounds = array<i64: 8, 1>}, {pipeline_mode = #tpu.pipeline_mode<synchronous>, transform_indices = @transform_4, window_bounds = array<i64: 8, 1>}, {transform_indices = @transform_5, window_bounds = array<i64: 8, 2048>}]} {
    %c0 = arith.constant 0 : index
    %c0_0 = arith.constant 0 : index
    %0 = vector.load %arg1[%c0, %c0_0] : memref<8x48xbf16, #tpu.memory_space<vmem>>, vector<8x48xbf16>
    %c0_1 = arith.constant 0 : index
    %c0_2 = arith.constant 0 : index
    %1 = vector.load %arg2[%c0_1, %c0_2] : memref<48x2048xbf16, #tpu.memory_space<vmem>>, vector<48x2048xbf16>
    %cst = arith.constant dense<0.000000e+00> : vector<8x2048xf32>
    %2 = tpu.matmul %0, %1, %cst {dimension_numbers = #tpu.dot_dimension_numbers<[1], [0], [0], [1], [0, 0, 1, 1], [], []>} : vector<8x48xbf16>, vector<48x2048xbf16>, vector<8x2048xf32> -> vector<8x2048xf32>
    %c0_3 = arith.constant 0 : index
    %c0_4 = arith.constant 0 : index
    %3 = vector.load %arg3[%c0_3, %c0_4] : memref<8x1xf32, #tpu.memory_space<vmem>>, vector<8x1xf32>
    %4 = vector.broadcast %3 : vector<8x1xf32> to vector<8x2048xf32>
    %5 = arith.addf %2, %4 : vector<8x2048xf32>
    %cst_5 = arith.constant 0.000000e+00 : f32
    %6 = vector.broadcast %cst_5 : f32 to vector<8x2048xf32>
    %7 = arith.cmpf ogt, %5, %6 : vector<8x2048xf32>
    %cst_6 = arith.constant 2.000000e-01 : f32
    %8 = vector.broadcast %cst_6 : f32 to vector<8x2048xf32>
    %9 = arith.mulf %8, %5 : vector<8x2048xf32>
    %10 = arith.select %7, %5, %9 : vector<8x2048xi1>, vector<8x2048xf32>
    %c0_7 = arith.constant 0 : index
    %c0_8 = arith.constant 0 : index
    %11 = vector.load %arg4[%c0_7, %c0_8] : memref<8x1xf32, #tpu.memory_space<vmem>>, vector<8x1xf32>
    %12 = vector.broadcast %11 : vector<8x1xf32> to vector<8x2048xf32>
    %13 = arith.mulf %10, %12 : vector<8x2048xf32>
    %c0_9 = arith.constant 0 : index
    %c0_10 = arith.constant 0 : index
    %14 = vector.load %arg5[%c0_9, %c0_10] : memref<8x1xf32, #tpu.memory_space<vmem>>, vector<8x1xf32>
    %15 = vector.broadcast %14 : vector<8x1xf32> to vector<8x2048xf32>
    %16 = arith.addf %13, %15 : vector<8x2048xf32>
    %c0_11 = arith.constant 0 : index
    %c0_12 = arith.constant 0 : index
    %17 = vector.load %arg6[%c0_11, %c0_12] : memref<8x2048xf32, #tpu.memory_space<vmem>>, vector<8x2048xf32>
    tpu.vector_store %arg6[%c0_11, %c0_12], %16 {strides = array<i32>} : memref<8x2048xf32, #tpu.memory_space<vmem>>, vector<8x2048xf32>,
    return
  }
  func.func @transform_0(%arg0: i32) -> (i32, i32) {
    %c0_i32 = arith.constant 0 : i32
    %c0_i32_0 = arith.constant 0 : i32
    %c0_i32_1 = arith.constant 0 : i32
    return %c0_i32, %c0_i32_0 : i32, i32
  }
  func.func @transform_1(%arg0: i32) -> (i32, i32) {
    %c0_i32 = arith.constant 0 : i32
    %c0_i32_0 = arith.constant 0 : i32
    return %c0_i32, %arg0 : i32, i32
  }
  func.func @transform_2(%arg0: i32) -> (i32, i32) {
    %c0_i32 = arith.constant 0 : i32
    %c0_i32_0 = arith.constant 0 : i32
    %c0_i32_1 = arith.constant 0 : i32
    return %c0_i32, %c0_i32_0 : i32, i32
  }
  func.func @transform_3(%arg0: i32) -> (i32, i32) {
    %c0_i32 = arith.constant 0 : i32
    %c0_i32_0 = arith.constant 0 : i32
    %c0_i32_1 = arith.constant 0 : i32
    return %c0_i32, %c0_i32_0 : i32, i32
  }
  func.func @transform_4(%arg0: i32) -> (i32, i32) {
    %c0_i32 = arith.constant 0 : i32
    %c0_i32_0 = arith.constant 0 : i32
    %c0_i32_1 = arith.constant 0 : i32
    return %c0_i32, %c0_i32_0 : i32, i32
  }
  func.func @transform_5(%arg0: i32) -> (i32, i32) {
    %c0_i32 = arith.constant 0 : i32
    %c0_i32_0 = arith.constant 0 : i32
    return %c0_i32, %arg0 : i32, i32
  }
}

module attributes {stable_mosaic.version = 11 : i64} {
  func.func @conv_mm_kernel(%arg0: i32, %arg1: memref<8x128xbf16, #tpu.memory_space<vmem>>, %arg2: memref<128x512xbf16, #tpu.memory_space<vmem>>, %arg3: memref<8x1xf32, #tpu.memory_space<vmem>>, %arg4: memref<8x1xf32, #tpu.memory_space<vmem>>, %arg5: memref<8x1xf32, #tpu.memory_space<vmem>>, %arg6: memref<8x512xf32, #tpu.memory_space<vmem>>) attributes {dimension_semantics = [#tpu.dimension_semantics<parallel>], iteration_bounds = array<i64: 1>, scalar_prefetch = 0 : i64, scratch_operands = 0 : i64, tpu.core_type = #tpu.core_type<tc>, window_params = [{pipeline_mode = #tpu.pipeline_mode<synchronous>, transform_indices = @transform_0, window_bounds = array<i64: 8, 128>}, {transform_indices = @transform_1, window_bounds = array<i64: 128, 512>}, {pipeline_mode = #tpu.pipeline_mode<synchronous>, transform_indices = @transform_2, window_bounds = array<i64: 8, 1>}, {pipeline_mode = #tpu.pipeline_mode<synchronous>, transform_indices = @transform_3, window_bounds = array<i64: 8, 1>}, {pipeline_mode = #tpu.pipeline_mode<synchronous>, transform_indices = @transform_4, window_bounds = array<i64: 8, 1>}, {transform_indices = @transform_5, window_bounds = array<i64: 8, 512>}]} {
    %c0 = arith.constant 0 : index
    %c0_0 = arith.constant 0 : index
    %0 = vector.load %arg1[%c0, %c0_0] : memref<8x128xbf16, #tpu.memory_space<vmem>>, vector<8x128xbf16>
    %c0_1 = arith.constant 0 : index
    %c0_2 = arith.constant 0 : index
    %1 = vector.load %arg2[%c0_1, %c0_2] : memref<128x512xbf16, #tpu.memory_space<vmem>>, vector<128x512xbf16>
    %cst = arith.constant dense<0.000000e+00> : vector<8x512xf32>
    %2 = tpu.matmul %0, %1, %cst {dimension_numbers = #tpu.dot_dimension_numbers<[1], [0], [0], [1], [0, 0, 1, 1], [], []>} : vector<8x128xbf16>, vector<128x512xbf16>, vector<8x512xf32> -> vector<8x512xf32>
    %c0_3 = arith.constant 0 : index
    %c0_4 = arith.constant 0 : index
    %3 = vector.load %arg3[%c0_3, %c0_4] : memref<8x1xf32, #tpu.memory_space<vmem>>, vector<8x1xf32>
    %4 = vector.broadcast %3 : vector<8x1xf32> to vector<8x512xf32>
    %5 = arith.addf %2, %4 : vector<8x512xf32>
    %cst_5 = arith.constant 0.000000e+00 : f32
    %6 = vector.broadcast %cst_5 : f32 to vector<8x512xf32>
    %7 = arith.cmpf ogt, %5, %6 : vector<8x512xf32>
    %cst_6 = arith.constant 2.000000e-01 : f32
    %8 = vector.broadcast %cst_6 : f32 to vector<8x512xf32>
    %9 = arith.mulf %8, %5 : vector<8x512xf32>
    %10 = arith.select %7, %5, %9 : vector<8x512xi1>, vector<8x512xf32>
    %c0_7 = arith.constant 0 : index
    %c0_8 = arith.constant 0 : index
    %11 = vector.load %arg4[%c0_7, %c0_8] : memref<8x1xf32, #tpu.memory_space<vmem>>, vector<8x1xf32>
    %12 = vector.broadcast %11 : vector<8x1xf32> to vector<8x512xf32>
    %13 = arith.mulf %10, %12 : vector<8x512xf32>
    %c0_9 = arith.constant 0 : index
    %c0_10 = arith.constant 0 : index
    %14 = vector.load %arg5[%c0_9, %c0_10] : memref<8x1xf32, #tpu.memory_space<vmem>>, vector<8x1xf32>
    %15 = vector.broadcast %14 : vector<8x1xf32> to vector<8x512xf32>
    %16 = arith.addf %13, %15 : vector<8x512xf32>
    %c0_11 = arith.constant 0 : index
    %c0_12 = arith.constant 0 : index
    %17 = vector.load %arg6[%c0_11, %c0_12] : memref<8x512xf32, #tpu.memory_space<vmem>>, vector<8x512xf32>
    tpu.vector_store %arg6[%c0_11, %c0_12], %16 {strides = array<i32>} : memref<8x512xf32, #tpu.memory_space<vmem>>, vector<8x512xf32>,
    return
  }
  func.func @transform_0(%arg0: i32) -> (i32, i32) {
    %c0_i32 = arith.constant 0 : i32
    %c0_i32_0 = arith.constant 0 : i32
    %c0_i32_1 = arith.constant 0 : i32
    return %c0_i32, %c0_i32_0 : i32, i32
  }
  func.func @transform_1(%arg0: i32) -> (i32, i32) {
    %c0_i32 = arith.constant 0 : i32
    %c0_i32_0 = arith.constant 0 : i32
    return %c0_i32, %arg0 : i32, i32
  }
  func.func @transform_2(%arg0: i32) -> (i32, i32) {
    %c0_i32 = arith.constant 0 : i32
    %c0_i32_0 = arith.constant 0 : i32
    %c0_i32_1 = arith.constant 0 : i32
    return %c0_i32, %c0_i32_0 : i32, i32
  }
  func.func @transform_3(%arg0: i32) -> (i32, i32) {
    %c0_i32 = arith.constant 0 : i32
    %c0_i32_0 = arith.constant 0 : i32
    %c0_i32_1 = arith.constant 0 : i32
    return %c0_i32, %c0_i32_0 : i32, i32
  }
  func.func @transform_4(%arg0: i32) -> (i32, i32) {
    %c0_i32 = arith.constant 0 : i32
    %c0_i32_0 = arith.constant 0 : i32
    %c0_i32_1 = arith.constant 0 : i32
    return %c0_i32, %c0_i32_0 : i32, i32
  }
  func.func @transform_5(%arg0: i32) -> (i32, i32) {
    %c0_i32 = arith.constant 0 : i32
    %c0_i32_0 = arith.constant 0 : i32
    return %c0_i32, %arg0 : i32, i32
  }
}

module attributes {stable_mosaic.version = 11 : i64} {
  func.func @conv_mm_kernel(%arg0: i32, %arg1: memref<16x128xbf16, #tpu.memory_space<vmem>>, %arg2: memref<128x128xbf16, #tpu.memory_space<vmem>>, %arg3: memref<16x1xf32, #tpu.memory_space<vmem>>, %arg4: memref<16x1xf32, #tpu.memory_space<vmem>>, %arg5: memref<16x1xf32, #tpu.memory_space<vmem>>, %arg6: memref<16x128xf32, #tpu.memory_space<vmem>>) attributes {dimension_semantics = [#tpu.dimension_semantics<parallel>], iteration_bounds = array<i64: 1>, scalar_prefetch = 0 : i64, scratch_operands = 0 : i64, tpu.core_type = #tpu.core_type<tc>, window_params = [{pipeline_mode = #tpu.pipeline_mode<synchronous>, transform_indices = @transform_0, window_bounds = array<i64: 16, 128>}, {transform_indices = @transform_1, window_bounds = array<i64: 128, 128>}, {pipeline_mode = #tpu.pipeline_mode<synchronous>, transform_indices = @transform_2, window_bounds = array<i64: 16, 1>}, {pipeline_mode = #tpu.pipeline_mode<synchronous>, transform_indices = @transform_3, window_bounds = array<i64: 16, 1>}, {pipeline_mode = #tpu.pipeline_mode<synchronous>, transform_indices = @transform_4, window_bounds = array<i64: 16, 1>}, {transform_indices = @transform_5, window_bounds = array<i64: 16, 128>}]} {
    %c0 = arith.constant 0 : index
    %c0_0 = arith.constant 0 : index
    %0 = vector.load %arg1[%c0, %c0_0] : memref<16x128xbf16, #tpu.memory_space<vmem>>, vector<16x128xbf16>
    %c0_1 = arith.constant 0 : index
    %c0_2 = arith.constant 0 : index
    %1 = vector.load %arg2[%c0_1, %c0_2] : memref<128x128xbf16, #tpu.memory_space<vmem>>, vector<128x128xbf16>
    %cst = arith.constant dense<0.000000e+00> : vector<16x128xf32>
    %2 = tpu.matmul %0, %1, %cst {dimension_numbers = #tpu.dot_dimension_numbers<[1], [0], [0], [1], [0, 0, 1, 1], [], []>} : vector<16x128xbf16>, vector<128x128xbf16>, vector<16x128xf32> -> vector<16x128xf32>
    %c0_3 = arith.constant 0 : index
    %c0_4 = arith.constant 0 : index
    %3 = vector.load %arg3[%c0_3, %c0_4] : memref<16x1xf32, #tpu.memory_space<vmem>>, vector<16x1xf32>
    %4 = vector.broadcast %3 : vector<16x1xf32> to vector<16x128xf32>
    %5 = arith.addf %2, %4 : vector<16x128xf32>
    %cst_5 = arith.constant 0.000000e+00 : f32
    %6 = vector.broadcast %cst_5 : f32 to vector<16x128xf32>
    %7 = arith.cmpf ogt, %5, %6 : vector<16x128xf32>
    %cst_6 = arith.constant 2.000000e-01 : f32
    %8 = vector.broadcast %cst_6 : f32 to vector<16x128xf32>
    %9 = arith.mulf %8, %5 : vector<16x128xf32>
    %10 = arith.select %7, %5, %9 : vector<16x128xi1>, vector<16x128xf32>
    %c0_7 = arith.constant 0 : index
    %c0_8 = arith.constant 0 : index
    %11 = vector.load %arg4[%c0_7, %c0_8] : memref<16x1xf32, #tpu.memory_space<vmem>>, vector<16x1xf32>
    %12 = vector.broadcast %11 : vector<16x1xf32> to vector<16x128xf32>
    %13 = arith.mulf %10, %12 : vector<16x128xf32>
    %c0_9 = arith.constant 0 : index
    %c0_10 = arith.constant 0 : index
    %14 = vector.load %arg5[%c0_9, %c0_10] : memref<16x1xf32, #tpu.memory_space<vmem>>, vector<16x1xf32>
    %15 = vector.broadcast %14 : vector<16x1xf32> to vector<16x128xf32>
    %16 = arith.addf %13, %15 : vector<16x128xf32>
    %c0_11 = arith.constant 0 : index
    %c0_12 = arith.constant 0 : index
    %17 = vector.load %arg6[%c0_11, %c0_12] : memref<16x128xf32, #tpu.memory_space<vmem>>, vector<16x128xf32>
    tpu.vector_store %arg6[%c0_11, %c0_12], %16 {strides = array<i32>} : memref<16x128xf32, #tpu.memory_space<vmem>>, vector<16x128xf32>,
    return
  }
  func.func @transform_0(%arg0: i32) -> (i32, i32) {
    %c0_i32 = arith.constant 0 : i32
    %c0_i32_0 = arith.constant 0 : i32
    %c0_i32_1 = arith.constant 0 : i32
    return %c0_i32, %c0_i32_0 : i32, i32
  }
  func.func @transform_1(%arg0: i32) -> (i32, i32) {
    %c0_i32 = arith.constant 0 : i32
    %c0_i32_0 = arith.constant 0 : i32
    return %c0_i32, %arg0 : i32, i32
  }
  func.func @transform_2(%arg0: i32) -> (i32, i32) {
    %c0_i32 = arith.constant 0 : i32
    %c0_i32_0 = arith.constant 0 : i32
    %c0_i32_1 = arith.constant 0 : i32
    return %c0_i32, %c0_i32_0 : i32, i32
  }
  func.func @transform_3(%arg0: i32) -> (i32, i32) {
    %c0_i32 = arith.constant 0 : i32
    %c0_i32_0 = arith.constant 0 : i32
    %c0_i32_1 = arith.constant 0 : i32
    return %c0_i32, %c0_i32_0 : i32, i32
  }
  func.func @transform_4(%arg0: i32) -> (i32, i32) {
    %c0_i32 = arith.constant 0 : i32
    %c0_i32_0 = arith.constant 0 : i32
    %c0_i32_1 = arith.constant 0 : i32
    return %c0_i32, %c0_i32_0 : i32, i32
  }
  func.func @transform_5(%arg0: i32) -> (i32, i32) {
    %c0_i32 = arith.constant 0 : i32
    %c0_i32_0 = arith.constant 0 : i32
    return %c0_i32, %arg0 : i32, i32
  }
}

module attributes {stable_mosaic.version = 11 : i64} {
  func.func @conv_mm_kernel(%arg0: i32, %arg1: memref<32x256xbf16, #tpu.memory_space<vmem>>, %arg2: memref<256x32xbf16, #tpu.memory_space<vmem>>, %arg3: memref<32x1xf32, #tpu.memory_space<vmem>>, %arg4: memref<32x1xf32, #tpu.memory_space<vmem>>, %arg5: memref<32x1xf32, #tpu.memory_space<vmem>>, %arg6: memref<32x32xf32, #tpu.memory_space<vmem>>) attributes {dimension_semantics = [#tpu.dimension_semantics<parallel>], iteration_bounds = array<i64: 1>, scalar_prefetch = 0 : i64, scratch_operands = 0 : i64, tpu.core_type = #tpu.core_type<tc>, window_params = [{pipeline_mode = #tpu.pipeline_mode<synchronous>, transform_indices = @transform_0, window_bounds = array<i64: 32, 256>}, {transform_indices = @transform_1, window_bounds = array<i64: 256, 32>}, {pipeline_mode = #tpu.pipeline_mode<synchronous>, transform_indices = @transform_2, window_bounds = array<i64: 32, 1>}, {pipeline_mode = #tpu.pipeline_mode<synchronous>, transform_indices = @transform_3, window_bounds = array<i64: 32, 1>}, {pipeline_mode = #tpu.pipeline_mode<synchronous>, transform_indices = @transform_4, window_bounds = array<i64: 32, 1>}, {transform_indices = @transform_5, window_bounds = array<i64: 32, 32>}]} {
    %c0 = arith.constant 0 : index
    %c0_0 = arith.constant 0 : index
    %0 = vector.load %arg1[%c0, %c0_0] : memref<32x256xbf16, #tpu.memory_space<vmem>>, vector<32x256xbf16>
    %c0_1 = arith.constant 0 : index
    %c0_2 = arith.constant 0 : index
    %1 = vector.load %arg2[%c0_1, %c0_2] : memref<256x32xbf16, #tpu.memory_space<vmem>>, vector<256x32xbf16>
    %cst = arith.constant dense<0.000000e+00> : vector<32x32xf32>
    %2 = tpu.matmul %0, %1, %cst {dimension_numbers = #tpu.dot_dimension_numbers<[1], [0], [0], [1], [0, 0, 1, 1], [], []>} : vector<32x256xbf16>, vector<256x32xbf16>, vector<32x32xf32> -> vector<32x32xf32>
    %c0_3 = arith.constant 0 : index
    %c0_4 = arith.constant 0 : index
    %3 = vector.load %arg3[%c0_3, %c0_4] : memref<32x1xf32, #tpu.memory_space<vmem>>, vector<32x1xf32>
    %4 = vector.broadcast %3 : vector<32x1xf32> to vector<32x32xf32>
    %5 = arith.addf %2, %4 : vector<32x32xf32>
    %cst_5 = arith.constant 0.000000e+00 : f32
    %6 = vector.broadcast %cst_5 : f32 to vector<32x32xf32>
    %7 = arith.cmpf ogt, %5, %6 : vector<32x32xf32>
    %cst_6 = arith.constant 2.000000e-01 : f32
    %8 = vector.broadcast %cst_6 : f32 to vector<32x32xf32>
    %9 = arith.mulf %8, %5 : vector<32x32xf32>
    %10 = arith.select %7, %5, %9 : vector<32x32xi1>, vector<32x32xf32>
    %c0_7 = arith.constant 0 : index
    %c0_8 = arith.constant 0 : index
    %11 = vector.load %arg4[%c0_7, %c0_8] : memref<32x1xf32, #tpu.memory_space<vmem>>, vector<32x1xf32>
    %12 = vector.broadcast %11 : vector<32x1xf32> to vector<32x32xf32>
    %13 = arith.mulf %10, %12 : vector<32x32xf32>
    %c0_9 = arith.constant 0 : index
    %c0_10 = arith.constant 0 : index
    %14 = vector.load %arg5[%c0_9, %c0_10] : memref<32x1xf32, #tpu.memory_space<vmem>>, vector<32x1xf32>
    %15 = vector.broadcast %14 : vector<32x1xf32> to vector<32x32xf32>
    %16 = arith.addf %13, %15 : vector<32x32xf32>
    %c0_11 = arith.constant 0 : index
    %c0_12 = arith.constant 0 : index
    %17 = vector.load %arg6[%c0_11, %c0_12] : memref<32x32xf32, #tpu.memory_space<vmem>>, vector<32x32xf32>
    tpu.vector_store %arg6[%c0_11, %c0_12], %16 {strides = array<i32>} : memref<32x32xf32, #tpu.memory_space<vmem>>, vector<32x32xf32>,
    return
  }
  func.func @transform_0(%arg0: i32) -> (i32, i32) {
    %c0_i32 = arith.constant 0 : i32
    %c0_i32_0 = arith.constant 0 : i32
    %c0_i32_1 = arith.constant 0 : i32
    return %c0_i32, %c0_i32_0 : i32, i32
  }
  func.func @transform_1(%arg0: i32) -> (i32, i32) {
    %c0_i32 = arith.constant 0 : i32
    %c0_i32_0 = arith.constant 0 : i32
    return %c0_i32, %arg0 : i32, i32
  }
  func.func @transform_2(%arg0: i32) -> (i32, i32) {
    %c0_i32 = arith.constant 0 : i32
    %c0_i32_0 = arith.constant 0 : i32
    %c0_i32_1 = arith.constant 0 : i32
    return %c0_i32, %c0_i32_0 : i32, i32
  }
  func.func @transform_3(%arg0: i32) -> (i32, i32) {
    %c0_i32 = arith.constant 0 : i32
    %c0_i32_0 = arith.constant 0 : i32
    %c0_i32_1 = arith.constant 0 : i32
    return %c0_i32, %c0_i32_0 : i32, i32
  }
  func.func @transform_4(%arg0: i32) -> (i32, i32) {
    %c0_i32 = arith.constant 0 : i32
    %c0_i32_0 = arith.constant 0 : i32
    %c0_i32_1 = arith.constant 0 : i32
    return %c0_i32, %c0_i32_0 : i32, i32
  }
  func.func @transform_5(%arg0: i32) -> (i32, i32) {
    %c0_i32 = arith.constant 0 : i32
    %c0_i32_0 = arith.constant 0 : i32
    return %c0_i32, %arg0 : i32, i32
  }
}

module attributes {stable_mosaic.version = 11 : i64} {
  func.func @kernel(%arg0: i32, %arg1: memref<2x512xbf16, #tpu.memory_space<vmem>>, %arg2: memref<512x256xbf16, #tpu.memory_space<vmem>>, %arg3: memref<1x256xf32, #tpu.memory_space<vmem>>, %arg4: memref<2x1xf32, #tpu.memory_space<vmem>>, %arg5: memref<2x10xf32, #tpu.memory_space<vmem>>) attributes {dimension_semantics = [#tpu.dimension_semantics<arbitrary>], iteration_bounds = array<i64: 1>, scalar_prefetch = 0 : i64, scratch_operands = 0 : i64, tpu.core_type = #tpu.core_type<tc>, window_params = [{pipeline_mode = #tpu.pipeline_mode<synchronous>, transform_indices = @transform_0, window_bounds = array<i64: 2, 512>}, {pipeline_mode = #tpu.pipeline_mode<synchronous>, transform_indices = @transform_1, window_bounds = array<i64: 512, 256>}, {pipeline_mode = #tpu.pipeline_mode<synchronous>, transform_indices = @transform_2, window_bounds = array<i64: 1, 256>}, {pipeline_mode = #tpu.pipeline_mode<synchronous>, transform_indices = @transform_3, window_bounds = array<i64: 2, 1>}, {pipeline_mode = #tpu.pipeline_mode<synchronous>, transform_indices = @transform_4, window_bounds = array<i64: 2, 10>}]} {
    %c0 = arith.constant 0 : index
    %c0_0 = arith.constant 0 : index
    %0 = vector.load %arg1[%c0, %c0_0] : memref<2x512xbf16, #tpu.memory_space<vmem>>, vector<2x512xbf16>
    %c0_1 = arith.constant 0 : index
    %c0_2 = arith.constant 0 : index
    %1 = vector.load %arg2[%c0_1, %c0_2] : memref<512x256xbf16, #tpu.memory_space<vmem>>, vector<512x256xbf16>
    %cst = arith.constant dense<0.000000e+00> : vector<2x256xf32>
    %2 = tpu.matmul %0, %1, %cst {dimension_numbers = #tpu.dot_dimension_numbers<[1], [0], [0], [1], [0, 0, 1, 1], [], []>} : vector<2x512xbf16>, vector<512x256xbf16>, vector<2x256xf32> -> vector<2x256xf32>
    %c0_3 = arith.constant 0 : index
    %c0_4 = arith.constant 0 : index
    %3 = vector.load %arg3[%c0_3, %c0_4] : memref<1x256xf32, #tpu.memory_space<vmem>>, vector<1x256xf32>
    %4 = vector.broadcast %3 : vector<1x256xf32> to vector<2x256xf32>
    %5 = arith.addf %2, %4 : vector<2x256xf32>
    %6 = vector.extract_strided_slice %5 {offsets = [0, 0], sizes = [2, 10], strides = [1, 1]} : vector<2x256xf32> to vector<2x10xf32>
    %cst_5 = arith.constant dense<0xFF800000> : vector<2xf32>
    %7 = vector.multi_reduction <maximumf>, %6, %cst_5 [1] : vector<2x10xf32> to vector<2xf32>
    %8 = vector.shape_cast %7 : vector<2xf32> to vector<2x1xf32>
    %9 = vector.broadcast %8 : vector<2x1xf32> to vector<2x10xf32>
    %10 = arith.subf %6, %9 : vector<2x10xf32>
    %11 = math.exp %10 : vector<2x10xf32>
    %cst_6 = arith.constant dense<0.000000e+00> : vector<2xf32>
    %12 = vector.multi_reduction <add>, %11, %cst_6 [1] : vector<2x10xf32> to vector<2xf32>
    %13 = vector.shape_cast %12 : vector<2xf32> to vector<2x1xf32>
    %14 = tpu.reciprocal %13 : vector<2x1xf32> -> vector<2x1xf32>
    %15 = vector.broadcast %14 : vector<2x1xf32> to vector<2x10xf32>
    %16 = arith.mulf %11, %15 : vector<2x10xf32>
    %c0_7 = arith.constant 0 : index
    %c0_8 = arith.constant 0 : index
    %17 = vector.load %arg5[%c0_7, %c0_8] : memref<2x10xf32, #tpu.memory_space<vmem>>, vector<2x10xf32>
    tpu.vector_store %arg5[%c0_7, %c0_8], %16 {strides = array<i32>} : memref<2x10xf32, #tpu.memory_space<vmem>>, vector<2x10xf32>,
    %18 = vector.extract_strided_slice %5 {offsets = [0, 128], sizes = [2, 1], strides = [1, 1]} : vector<2x256xf32> to vector<2x1xf32>
    %19 = math.absf %18 : vector<2x1xf32>
    %cst_9 = arith.constant 0.000000e+00 : f32
    %20 = vector.broadcast %cst_9 : f32 to vector<2x1xf32>
    %21 = arith.subf %20, %19 : vector<2x1xf32>
    %22 = math.exp %21 : vector<2x1xf32>
    %cst_10 = arith.constant 1.000000e+00 : f32
    %23 = vector.broadcast %cst_10 : f32 to vector<2x1xf32>
    %24 = arith.addf %23, %22 : vector<2x1xf32>
    %cst_11 = arith.constant 1.000000e+00 : f32
    %25 = vector.broadcast %cst_11 : f32 to vector<2x1xf32>
    %26 = arith.divf %25, %24 : vector<2x1xf32>
    %cst_12 = arith.constant 0.000000e+00 : f32
    %27 = vector.broadcast %cst_12 : f32 to vector<2x1xf32>
    %28 = arith.cmpf oge, %18, %27 : vector<2x1xf32>
    %cst_13 = arith.constant 1.000000e+00 : f32
    %29 = vector.broadcast %cst_13 : f32 to vector<2x1xf32>
    %30 = arith.subf %29, %26 : vector<2x1xf32>
    %31 = arith.select %28, %26, %30 : vector<2x1xi1>, vector<2x1xf32>
    %c0_14 = arith.constant 0 : index
    %c0_15 = arith.constant 0 : index
    %32 = vector.load %arg4[%c0_14, %c0_15] : memref<2x1xf32, #tpu.memory_space<vmem>>, vector<2x1xf32>
    tpu.vector_store %arg4[%c0_14, %c0_15], %31 {strides = array<i32>} : memref<2x1xf32, #tpu.memory_space<vmem>>, vector<2x1xf32>,
    return
  }
  func.func @transform_0(%arg0: i32) -> (i32, i32) {
    %c0_i32 = arith.constant 0 : i32
    %c0_i32_0 = arith.constant 0 : i32
    %c0_i32_1 = arith.constant 0 : i32
    return %c0_i32, %c0_i32_0 : i32, i32
  }
  func.func @transform_1(%arg0: i32) -> (i32, i32) {
    %c0_i32 = arith.constant 0 : i32
    %c0_i32_0 = arith.constant 0 : i32
    %c0_i32_1 = arith.constant 0 : i32
    return %c0_i32, %c0_i32_0 : i32, i32
  }
  func.func @transform_2(%arg0: i32) -> (i32, i32) {
    %c0_i32 = arith.constant 0 : i32
    %c0_i32_0 = arith.constant 0 : i32
    %c0_i32_1 = arith.constant 0 : i32
    return %c0_i32, %c0_i32_0 : i32, i32
  }
  func.func @transform_3(%arg0: i32) -> (i32, i32) {
    %c0_i32 = arith.constant 0 : i32
    %c0_i32_0 = arith.constant 0 : i32
    %c0_i32_1 = arith.constant 0 : i32
    return %c0_i32, %c0_i32_0 : i32, i32
  }
  func.func @transform_4(%arg0: i32) -> (i32, i32) {
    %c0_i32 = arith.constant 0 : i32
    %c0_i32_0 = arith.constant 0 : i32
    %c0_i32_1 = arith.constant 0 : i32
    return %c0_i32, %c0_i32_0 : i32, i32
  }
}

</mosaic_0001>

<llo_original>
// kernel: discriminator_forward.5
$region0: #{discriminator_forward.5}
  #allocation0 [shape = 'u32[]', space=smem, size = 0x4, offset = 0x4, fixed_abs, tag = 'smem constant byte address 0x4 - core index']
  #allocation1 [shape = 'u32[144,128]{1,0:T(1,128)}', space=vmem, size = 0x12000, scoped, tag = 'internal scratch']
  %s0 = inlined_call_operand.vmem [shape: bf16[8,48], index: 0, kind: input, shape index: {}]
  %s1 = inlined_call_operand.vmem [shape: bf16[48,2048], index: 1, kind: input, shape index: {}]
  %s2 = inlined_call_operand.vmem [shape: f32[8,1], index: 2, kind: input, shape index: {}]
  %s3 = inlined_call_operand.vmem [shape: f32[8,1], index: 3, kind: input, shape index: {}]
  %s4 = inlined_call_operand.vmem [shape: f32[8,1], index: 4, kind: input, shape index: {}]
  %s5 = inlined_call_operand.vmem [shape: f32[8,2048], index: 5, kind: output, shape index: {}]
  %s6 = sld [smem:[#allocation0]]
  $region30: #{discriminator_forward.5} parent=0
    _
  %s8 = ssub.s32 1, %s6
  %s9 = scalar_select 0, %s8, %s6
  // Predicated region
  $region2: #{discriminator_forward.5} parent=0 // pred_check
    _
  $region3: #{discriminator_forward.5} parent=0 // pred_check_branch
    %11 = sbr.rel (0) target = $region5
  $region4: #{discriminator_forward.5} parent=0 // pred_region
    _
  $region5: #{discriminator_forward.5} parent=0 // pred_fallthru
    _
  // Predicated region
  $region6: #{discriminator_forward.5} parent=0 // pred_check
    _
  $region7: #{discriminator_forward.5} parent=0 // pred_check_branch
    %13 = sbr.rel (0) target = $region9
  $region8: #{discriminator_forward.5} parent=0 // pred_region
    _
  $region9: #{discriminator_forward.5} parent=0 // pred_fallthru
    _
  // Predicated region
  $region10: #{discriminator_forward.5} parent=0 // pred_check
    _
  $region11: #{discriminator_forward.5} parent=0 // pred_check_branch
    %15 = sbr.rel (0) target = $region13
  $region12: #{discriminator_forward.5} parent=0 // pred_region
    _
  $region13: #{discriminator_forward.5} parent=0 // pred_fallthru
    _
  // Predicated region
  $region14: #{discriminator_forward.5} parent=0 // pred_check
    _
  $region15: #{discriminator_forward.5} parent=0 // pred_check_branch
    %17 = sbr.rel (0) target = $region17
  $region16: #{discriminator_forward.5} parent=0 // pred_region
    _
  $region17: #{discriminator_forward.5} parent=0 // pred_fallthru
    _
  // Predicated region
  $region18: #{discriminator_forward.5} parent=0 // pred_check
    _
  $region19: #{discriminator_forward.5} parent=0 // pred_check_branch
    %19 = sbr.rel (0) target = $region21
  $region20: #{discriminator_forward.5} parent=0 // pred_region
    _
  $region21: #{discriminator_forward.5} parent=0 // pred_fallthru
    _
  %v21 = vld [vmem:[%s0] sm:$0xf]
  %v22 = vld [vmem:[%s1] sm:$0xff]
  %v23 = vld [vmem:[%s1 + $0x8] sm:$0xff]
  %v24 = vld [vmem:[%s1 + $0x10] sm:$0xff]
  %v25 = vld [vmem:[%s1 + $0x18] sm:$0xff]
  %v26 = vld [vmem:[%s1 + $0x20] sm:$0xff]
  %v27 = vld [vmem:[%s1 + $0x28] sm:$0xff]
  %v28 = vld [vmem:[%s1 + $0x30] sm:$0xff]
  %v29 = vld [vmem:[%s1 + $0x38] sm:$0xff]
  %v30 = vld [vmem:[%s1 + $0x40] sm:$0xff]
  %v31 = vld [vmem:[%s1 + $0x48] sm:$0xff]
  %v32 = vld [vmem:[%s1 + $0x50] sm:$0xff]
  %v33 = vld [vmem:[%s1 + $0x58] sm:$0xff]
  %v34 = vld [vmem:[%s1 + $0x60] sm:$0xff]
  %v35 = vld [vmem:[%s1 + $0x68] sm:$0xff]
  %v36 = vld [vmem:[%s1 + $0x70] sm:$0xff]
  %v37 = vld [vmem:[%s1 + $0x78] sm:$0xff]
  %v38 = vld [vmem:[%s1 + $0x80] sm:$0xff]
  %v39 = vld [vmem:[%s1 + $0x88] sm:$0xff]
  %v40 = vld [vmem:[%s1 + $0x90] sm:$0xff]
  %v41 = vld [vmem:[%s1 + $0x98] sm:$0xff]
  %v42 = vld [vmem:[%s1 + $0xa0] sm:$0xff]
  %v43 = vld [vmem:[%s1 + $0xa8] sm:$0xff]
  %v44 = vld [vmem:[%s1 + $0xb0] sm:$0xff]
  %v45 = vld [vmem:[%s1 + $0xb8] sm:$0xff]
  %v46 = vld [vmem:[%s1 + $0xc0] sm:$0xff]
  %v47 = vld [vmem:[%s1 + $0xc8] sm:$0xff]
  %v48 = vld [vmem:[%s1 + $0xd0] sm:$0xff]
  %v49 = vld [vmem:[%s1 + $0xd8] sm:$0xff]
  %v50 = vld [vmem:[%s1 + $0xe0] sm:$0xff]
  %v51 = vld [vmem:[%s1 + $0xe8] sm:$0xff]
  %v52 = vld [vmem:[%s1 + $0xf0] sm:$0xff]
  %v53 = vld [vmem:[%s1 + $0xf8] sm:$0xff]
  %v54 = vld [vmem:[%s1 + $0x100] sm:$0xff]
  %v55 = vld [vmem:[%s1 + $0x108] sm:$0xff]
  %v56 = vld [vmem:[%s1 + $0x110] sm:$0xff]
  %v57 = vld [vmem:[%s1 + $0x118] sm:$0xff]
  %v58 = vld [vmem:[%s1 + $0x120] sm:$0xff]
  %v59 = vld [vmem:[%s1 + $0x128] sm:$0xff]
  %v60 = vld [vmem:[%s1 + $0x130] sm:$0xff]
  %v61 = vld [vmem:[%s1 + $0x138] sm:$0xff]
  %v62 = vld [vmem:[%s1 + $0x140] sm:$0xff]
  %v63 = vld [vmem:[%s1 + $0x148] sm:$0xff]
  %v64 = vld [vmem:[%s1 + $0x150] sm:$0xff]
  %v65 = vld [vmem:[%s1 + $0x158] sm:$0xff]
  %v66 = vld [vmem:[%s1 + $0x160] sm:$0xff]
  %v67 = vld [vmem:[%s1 + $0x168] sm:$0xff]
  %v68 = vld [vmem:[%s1 + $0x170] sm:$0xff]
  %v69 = vld [vmem:[%s1 + $0x178] sm:$0xff]
  %v70 = vld [vmem:[%s2] sm:$0xff]
  %72 = vset.pattern.permute.xlu0 0
  %73 = vperm.xlu0 %72, %v70
  %v74 = vpop.permute.xlu0 %73
  %v124 = vunpack.c.l.b16 %v22
  %v125 = vunpack.c.h.b16 %v22
  %v126 = vunpack.c.l.b16 %v23
  %v127 = vunpack.c.h.b16 %v23
  %v128 = vunpack.c.l.b16 %v24
  %v129 = vunpack.c.h.b16 %v24
  %v130 = vunpack.c.l.b16 %v25
  %v131 = vunpack.c.h.b16 %v25
  %v132 = vunpack.c.l.b16 %v26
  %v133 = vunpack.c.h.b16 %v26
  %v134 = vunpack.c.l.b16 %v27
  %v135 = vunpack.c.h.b16 %v27
  %v136 = vunpack.c.l.b16 %v28
  %v137 = vunpack.c.h.b16 %v28
  %v138 = vunpack.c.l.b16 %v29
  %v139 = vunpack.c.h.b16 %v29
  %v140 = vunpack.c.l.b16 %v30
  %v141 = vunpack.c.h.b16 %v30
  %v142 = vunpack.c.l.b16 %v31
  %v143 = vunpack.c.h.b16 %v31
  %v144 = vunpack.c.l.b16 %v32
  %v145 = vunpack.c.h.b16 %v32
  %v146 = vunpack.c.l.b16 %v33
  %v147 = vunpack.c.h.b16 %v33
  %v148 = vunpack.c.l.b16 %v34
  %v149 = vunpack.c.h.b16 %v34
  %v150 = vunpack.c.l.b16 %v35
  %v151 = vunpack.c.h.b16 %v35
  %v152 = vunpack.c.l.b16 %v36
  %v153 = vunpack.c.h.b16 %v36
  %v154 = vunpack.c.l.b16 %v37
  %v155 = vunpack.c.h.b16 %v37
  %v156 = vunpack.c.l.b16 %v38
  %v157 = vunpack.c.h.b16 %v38
  %v158 = vunpack.c.l.b16 %v39
  %v159 = vunpack.c.h.b16 %v39
  %v160 = vunpack.c.l.b16 %v40
  %v161 = vunpack.c.h.b16 %v40
  %v162 = vunpack.c.l.b16 %v41
  %v163 = vunpack.c.h.b16 %v41
  %v164 = vunpack.c.l.b16 %v42
  %v165 = vunpack.c.h.b16 %v42
  %v166 = vunpack.c.l.b16 %v43
  %v167 = vunpack.c.h.b16 %v43
  %v168 = vunpack.c.l.b16 %v44
  %v169 = vunpack.c.h.b16 %v44
  %v170 = vunpack.c.l.b16 %v45
  %v171 = vunpack.c.h.b16 %v45
  %v172 = vunpack.c.l.b16 %v46
  %v173 = vunpack.c.h.b16 %v46
  %v174 = vunpack.c.l.b16 %v47
  %v175 = vunpack.c.h.b16 %v47
  %v176 = vunpack.c.l.b16 %v48
  %v177 = vunpack.c.h.b16 %v48
  %v178 = vunpack.c.l.b16 %v49
  %v179 = vunpack.c.h.b16 %v49
  %v180 = vunpack.c.l.b16 %v50
  %v181 = vunpack.c.h.b16 %v50
  %v182 = vunpack.c.l.b16 %v51
  %v183 = vunpack.c.h.b16 %v51
  %v184 = vunpack.c.l.b16 %v52
  %v185 = vunpack.c.h.b16 %v52
  %v186 = vunpack.c.l.b16 %v53
  %v187 = vunpack.c.h.b16 %v53
  %v188 = vunpack.c.l.b16 %v54
  %v189 = vunpack.c.h.b16 %v54
  %v190 = vunpack.c.l.b16 %v55
  %v191 = vunpack.c.h.b16 %v55
  %v192 = vunpack.c.l.b16 %v56
  %v193 = vunpack.c.h.b16 %v56
  %v194 = vunpack.c.l.b16 %v57
  %v195 = vunpack.c.h.b16 %v57
  %v196 = vunpack.c.l.b16 %v58
  %v197 = vunpack.c.h.b16 %v58
  %v198 = vunpack.c.l.b16 %v59
  %v199 = vunpack.c.h.b16 %v59
  %v200 = vunpack.c.l.b16 %v60
  %v201 = vunpack.c.h.b16 %v60
  %v202 = vunpack.c.l.b16 %v61
  %v203 = vunpack.c.h.b16 %v61
  %v204 = vunpack.c.l.b16 %v62
  %v205 = vunpack.c.h.b16 %v62
  %v206 = vunpack.c.l.b16 %v63
  %v207 = vunpack.c.h.b16 %v63
  %v208 = vunpack.c.l.b16 %v64
  %v209 = vunpack.c.h.b16 %v64
  %v210 = vunpack.c.l.b16 %v65
  %v211 = vunpack.c.h.b16 %v65
  %v212 = vunpack.c.l.b16 %v66
  %v213 = vunpack.c.h.b16 %v66
  %v214 = vunpack.c.l.b16 %v67
  %v215 = vunpack.c.h.b16 %v67
  %v216 = vunpack.c.l.b16 %v68
  %v217 = vunpack.c.h.b16 %v68
  %v218 = vunpack.c.l.b16 %v69
  %v219 = vunpack.c.h.b16 %v69
  %v220 = vpack.c.b16 %v140, %v124
  %v221 = vpack.c.b16 %v141, %v125
  %v222 = vpack.c.b16 %v142, %v126
  %v223 = vpack.c.b16 %v143, %v127
  %v224 = vpack.c.b16 %v144, %v128
  %v225 = vpack.c.b16 %v145, %v129
  %v226 = vpack.c.b16 %v146, %v130
  %v227 = vpack.c.b16 %v147, %v131
  %v228 = vpack.c.b16 %v148, %v132
  %v229 = vpack.c.b16 %v149, %v133
  %v230 = vpack.c.b16 %v150, %v134
  %v231 = vpack.c.b16 %v151, %v135
  %v232 = vpack.c.b16 %v152, %v136
  %v233 = vpack.c.b16 %v153, %v137
  %v234 = vpack.c.b16 %v154, %v138
  %v235 = vpack.c.b16 %v155, %v139
  %v236 = vpack.c.b16 %v172, %v156
  %v237 = vpack.c.b16 %v173, %v157
  %v238 = vpack.c.b16 %v174, %v158
  %v239 = vpack.c.b16 %v175, %v159
  %v240 = vpack.c.b16 %v176, %v160
  %v241 = vpack.c.b16 %v177, %v161
  %v242 = vpack.c.b16 %v178, %v162
  %v243 = vpack.c.b16 %v179, %v163
  %v244 = vpack.c.b16 %v180, %v164
  %v245 = vpack.c.b16 %v181, %v165
  %v246 = vpack.c.b16 %v182, %v166
  %v247 = vpack.c.b16 %v183, %v167
  %v248 = vpack.c.b16 %v184, %v168
  %v249 = vpack.c.b16 %v185, %v169
  %v250 = vpack.c.b16 %v186, %v170
  %v251 = vpack.c.b16 %v187, %v171
  %v252 = vpack.c.b16 %v204, %v188
  %v253 = vpack.c.b16 %v205, %v189
  %v254 = vpack.c.b16 %v206, %v190
  %v255 = vpack.c.b16 %v207, %v191
  %v256 = vpack.c.b16 %v208, %v192
  %v257 = vpack.c.b16 %v209, %v193
  %v258 = vpack.c.b16 %v210, %v194
  %v259 = vpack.c.b16 %v211, %v195
  %v260 = vpack.c.b16 %v212, %v196
  %v261 = vpack.c.b16 %v213, %v197
  %v262 = vpack.c.b16 %v214, %v198
  %v263 = vpack.c.b16 %v215, %v199
  %v264 = vpack.c.b16 %v216, %v200
  %v265 = vpack.c.b16 %v217, %v201
  %v266 = vpack.c.b16 %v218, %v202
  %v267 = vpack.c.b16 %v219, %v203
  %vm316 = vcmask 392192
  %v318 = vsel %vm316, %v21, 0
  %320 = vmatprep.subr.bf16.mxu0 %v221
  %321 = vmatpush1.bf16.msra.mxu0 %v220
  %322 = vmatprep.subr.bf16.mxu0 %v237
  %323 = vmatpush1.bf16.msra.mxu0 %v236
  %324 = vmatprep.subr.bf16.mxu0 %v253
  %325 = vmatpush1.bf16.msra.mxu0 %v252
  %326 = vmatprep.subr.bf16.mxu0 0
  %327 = vmatpush1.bf16.msra.mxu0 0
  %328 = vmatprep.subr.bf16.mxu0 0
  %329 = vmatpush1.bf16.msra.mxu0 0
  %330 = vmatprep.subr.bf16.mxu0 0
  %331 = vmatpush1.bf16.msra.mxu0 0
  %332 = vmatprep.subr.bf16.mxu0 0
  %333 = vmatpush1.bf16.msra.mxu0 0
  %334 = vmatprep.subr.bf16.mxu0 0
  %335 = vmatpush1.bf16.msra.mxu0 0
  %336 = vmatprep.subr.bf16.mxu0 0
  %337 = vmatpush1.bf16.msra.mxu0 0
  %338 = vmatprep.subr.bf16.mxu0 0
  %339 = vmatpush1.bf16.msra.mxu0 0
  %340 = vmatprep.subr.bf16.mxu0 0
  %341 = vmatpush1.bf16.msra.mxu0 0
  %342 = vmatprep.subr.bf16.mxu0 0
  %343 = vmatpush1.bf16.msra.mxu0 0
  %344 = vmatprep.subr.bf16.mxu0 0
  %345 = vmatpush1.bf16.msra.mxu0 0
  %346 = vmatprep.subr.bf16.mxu0 0
  %347 = vmatpush1.bf16.msra.mxu0 0
  %348 = vmatprep.subr.bf16.mxu0 0
  %349 = vmatpush1.bf16.msra.mxu0 0
  %350 = vmatprep.subr.bf16.mxu0 0
  %351 = vmatpush1.bf16.msra.mxu0 0
  %352 = vmatprep.mubr.bf16.mxu0 0
  %353 = vmatmul.mubr.bf16.gmra.mrb[0].mxu0 %v318
  %v354 = vpop.f32.mrb[0].mxu0
  %v355 = vadd.f32 %v74, %v354
  %v356 = vpop.f32.mrb[0].mxu0
  %v357 = vadd.f32 %v74, %v356
  %v358 = vpop.f32.mrb[0].mxu0
  %v359 = vpop.f32.mrb[0].mxu0
  %360 = vdwg.mxu0
  %361 = vmatprep.subr.bf16.mxu0 %v223
  %362 = vmatpush1.bf16.msra.mxu0 %v222
  %363 = vmatprep.subr.bf16.mxu0 %v239
  %364 = vmatpush1.bf16.msra.mxu0 %v238
  %365 = vmatprep.subr.bf16.mxu0 %v255
  %366 = vmatpush1.bf16.msra.mxu0 %v254
  %367 = vmatprep.subr.bf16.mxu0 0
  %368 = vmatpush1.bf16.msra.mxu0 0
  %369 = vmatprep.subr.bf16.mxu0 0
  %370 = vmatpush1.bf16.msra.mxu0 0
  %371 = vmatprep.subr.bf16.mxu0 0
  %372 = vmatpush1.bf16.msra.mxu0 0
  %373 = vmatprep.subr.bf16.mxu0 0
  %374 = vmatpush1.bf16.msra.mxu0 0
  %375 = vmatprep.subr.bf16.mxu0 0
  %376 = vmatpush1.bf16.msra.mxu0 0
  %377 = vmatprep.subr.bf16.mxu0 0
  %378 = vmatpush1.bf16.msra.mxu0 0
  %379 = vmatprep.subr.bf16.mxu0 0
  %380 = vmatpush1.bf16.msra.mxu0 0
  %381 = vmatprep.subr.bf16.mxu0 0
  %382 = vmatpush1.bf16.msra.mxu0 0
  %383 = vmatprep.subr.bf16.mxu0 0
  %384 = vmatpush1.bf16.msra.mxu0 0
  %385 = vmatprep.subr.bf16.mxu0 0
  %386 = vmatpush1.bf16.msra.mxu0 0
  %387 = vmatprep.subr.bf16.mxu0 0
  %388 = vmatpush1.bf16.msra.mxu0 0
  %389 = vmatprep.subr.bf16.mxu0 0
  %390 = vmatpush1.bf16.msra.mxu0 0
  %391 = vmatprep.subr.bf16.mxu0 0
  %392 = vmatpush1.bf16.msra.mxu0 0
  %393 = vmatprep.mubr.bf16.mxu0 0
  %394 = vmatmul.mubr.bf16.gmra.mrb[0].mxu0 %v318
  %v395 = vpop.f32.mrb[0].mxu0
  %v396 = vadd.f32 %v74, %v395
  %v397 = vpop.f32.mrb[0].mxu0
  %v398 = vadd.f32 %v74, %v397
  %v399 = vpop.f32.mrb[0].mxu0
  %v400 = vpop.f32.mrb[0].mxu0
  %401 = vdwg.mxu0
  %402 = vmatprep.subr.bf16.mxu0 %v225
  %403 = vmatpush1.bf16.msra.mxu0 %v224
  %404 = vmatprep.subr.bf16.mxu0 %v241
  %405 = vmatpush1.bf16.msra.mxu0 %v240
  %406 = vmatprep.subr.bf16.mxu0 %v257
  %407 = vmatpush1.bf16.msra.mxu0 %v256
  %408 = vmatprep.subr.bf16.mxu0 0
  %409 = vmatpush1.bf16.msra.mxu0 0
  %410 = vmatprep.subr.bf16.mxu0 0
  %411 = vmatpush1.bf16.msra.mxu0 0
  %412 = vmatprep.subr.bf16.mxu0 0
  %413 = vmatpush1.bf16.msra.mxu0 0
  %414 = vmatprep.subr.bf16.mxu0 0
  %415 = vmatpush1.bf16.msra.mxu0 0
  %416 = vmatprep.subr.bf16.mxu0 0
  %417 = vmatpush1.bf16.msra.mxu0 0
  %418 = vmatprep.subr.bf16.mxu0 0
  %419 = vmatpush1.bf16.msra.mxu0 0
  %420 = vmatprep.subr.bf16.mxu0 0
  %421 = vmatpush1.bf16.msra.mxu0 0
  %422 = vmatprep.subr.bf16.mxu0 0
  %423 = vmatpush1.bf16.msra.mxu0 0
  %424 = vmatprep.subr.bf16.mxu0 0
  %425 = vmatpush1.bf16.msra.mxu0 0
  %426 = vmatprep.subr.bf16.mxu0 0
  %427 = vmatpush1.bf16.msra.mxu0 0
  %428 = vmatprep.subr.bf16.mxu0 0
  %429 = vmatpush1.bf16.msra.mxu0 0
  %430 = vmatprep.subr.bf16.mxu0 0
  %431 = vmatpush1.bf16.msra.mxu0 0
  %432 = vmatprep.subr.bf16.mxu0 0
  %433 = vmatpush1.bf16.msra.mxu0 0
  %434 = vmatprep.mubr.bf16.mxu0 0
  %435 = vmatmul.mubr.bf16.gmra.mrb[0].mxu0 %v318
  %v436 = vpop.f32.mrb[0].mxu0
  %v437 = vadd.f32 %v74, %v436
  %v438 = vpop.f32.mrb[0].mxu0
  %v439 = vadd.f32 %v74, %v438
  %v440 = vpop.f32.mrb[0].mxu0
  %v441 = vpop.f32.mrb[0].mxu0
  %442 = vdwg.mxu0
  %443 = vmatprep.subr.bf16.mxu0 %v227
  %444 = vmatpush1.bf16.msra.mxu0 %v226
  %445 = vmatprep.subr.bf16.mxu0 %v243
  %446 = vmatpush1.bf16.msra.mxu0 %v242
  %447 = vmatprep.subr.bf16.mxu0 %v259
  %448 = vmatpush1.bf16.msra.mxu0 %v258
  %449 = vmatprep.subr.bf16.mxu0 0
  %450 = vmatpush1.bf16.msra.mxu0 0
  %451 = vmatprep.subr.bf16.mxu0 0
  %452 = vmatpush1.bf16.msra.mxu0 0
  %453 = vmatprep.subr.bf16.mxu0 0
  %454 = vmatpush1.bf16.msra.mxu0 0
  %455 = vmatprep.subr.bf16.mxu0 0
  %456 = vmatpush1.bf16.msra.mxu0 0
  %457 = vmatprep.subr.bf16.mxu0 0
  %458 = vmatpush1.bf16.msra.mxu0 0
  %459 = vmatprep.subr.bf16.mxu0 0
  %460 = vmatpush1.bf16.msra.mxu0 0
  %461 = vmatprep.subr.bf16.mxu0 0
  %462 = vmatpush1.bf16.msra.mxu0 0
  %463 = vmatprep.subr.bf16.mxu0 0
  %464 = vmatpush1.bf16.msra.mxu0 0
  %465 = vmatprep.subr.bf16.mxu0 0
  %466 = vmatpush1.bf16.msra.mxu0 0
  %467 = vmatprep.subr.bf16.mxu0 0
  %468 = vmatpush1.bf16.msra.mxu0 0
  %469 = vmatprep.subr.bf16.mxu0 0
  %470 = vmatpush1.bf16.msra.mxu0 0
  %471 = vmatprep.subr.bf16.mxu0 0
  %472 = vmatpush1.bf16.msra.mxu0 0
  %473 = vmatprep.subr.bf16.mxu0 0
  %474 = vmatpush1.bf16.msra.mxu0 0
  %475 = vmatprep.mubr.bf16.mxu0 0
  %476 = vmatmul.mubr.bf16.gmra.mrb[0].mxu0 %v318
  %v477 = vpop.f32.mrb[0].mxu0
  %v478 = vadd.f32 %v74, %v477
  %v479 = vpop.f32.mrb[0].mxu0
  %v480 = vadd.f32 %v74, %v479
  %v481 = vpop.f32.mrb[0].mxu0
  %v482 = vpop.f32.mrb[0].mxu0
  %483 = vdwg.mxu0
  %484 = vmatprep.subr.bf16.mxu0 %v229
  %485 = vmatpush1.bf16.msra.mxu0 %v228
  %486 = vmatprep.subr.bf16.mxu0 %v245
  %487 = vmatpush1.bf16.msra.mxu0 %v244
  %488 = vmatprep.subr.bf16.mxu0 %v261
  %489 = vmatpush1.bf16.msra.mxu0 %v260
  %490 = vmatprep.subr.bf16.mxu0 0
  %491 = vmatpush1.bf16.msra.mxu0 0
  %492 = vmatprep.subr.bf16.mxu0 0
  %493 = vmatpush1.bf16.msra.mxu0 0
  %494 = vmatprep.subr.bf16.mxu0 0
  %495 = vmatpush1.bf16.msra.mxu0 0
  %496 = vmatprep.subr.bf16.mxu0 0
  %497 = vmatpush1.bf16.msra.mxu0 0
  %498 = vmatprep.subr.bf16.mxu0 0
  %499 = vmatpush1.bf16.msra.mxu0 0
  %500 = vmatprep.subr.bf16.mxu0 0
  %501 = vmatpush1.bf16.msra.mxu0 0
  %502 = vmatprep.subr.bf16.mxu0 0
  %503 = vmatpush1.bf16.msra.mxu0 0
  %504 = vmatprep.subr.bf16.mxu0 0
  %505 = vmatpush1.bf16.msra.mxu0 0
  %506 = vmatprep.subr.bf16.mxu0 0
  %507 = vmatpush1.bf16.msra.mxu0 0
  %508 = vmatprep.subr.bf16.mxu0 0
  %509 = vmatpush1.bf16.msra.mxu0 0
  %510 = vmatprep.subr.bf16.mxu0 0
  %511 = vmatpush1.bf16.msra.mxu0 0
  %512 = vmatprep.subr.bf16.mxu0 0
  %513 = vmatpush1.bf16.msra.mxu0 0
  %514 = vmatprep.subr.bf16.mxu0 0
  %515 = vmatpush1.bf16.msra.mxu0 0
  %516 = vmatprep.mubr.bf16.mxu0 0
  %517 = vmatmul.mubr.bf16.gmra.mrb[0].mxu0 %v318
  %v518 = vpop.f32.mrb[0].mxu0
  %v519 = vadd.f32 %v74, %v518
  %v520 = vpop.f32.mrb[0].mxu0
  %v521 = vadd.f32 %v74, %v520
  %v522 = vpop.f32.mrb[0].mxu0
  %v523 = vpop.f32.mrb[0].mxu0
  %524 = vdwg.mxu0
  %525 = vmatprep.subr.bf16.mxu0 %v231
  %526 = vmatpush1.bf16.msra.mxu0 %v230
  %527 = vmatprep.subr.bf16.mxu0 %v247
  %528 = vmatpush1.bf16.msra.mxu0 %v246
  %529 = vmatprep.subr.bf16.mxu0 %v263
  %530 = vmatpush1.bf16.msra.mxu0 %v262
  %531 = vmatprep.subr.bf16.mxu0 0
  %532 = vmatpush1.bf16.msra.mxu0 0
  %533 = vmatprep.subr.bf16.mxu0 0
  %534 = vmatpush1.bf16.msra.mxu0 0
  %535 = vmatprep.subr.bf16.mxu0 0
  %536 = vmatpush1.bf16.msra.mxu0 0
  %537 = vmatprep.subr.bf16.mxu0 0
  %538 = vmatpush1.bf16.msra.mxu0 0
  %539 = vmatprep.subr.bf16.mxu0 0
  %540 = vmatpush1.bf16.msra.mxu0 0
  %541 = vmatprep.subr.bf16.mxu0 0
  %542 = vmatpush1.bf16.msra.mxu0 0
  %543 = vmatprep.subr.bf16.mxu0 0
  %544 = vmatpush1.bf16.msra.mxu0 0
  %545 = vmatprep.subr.bf16.mxu0 0
  %546 = vmatpush1.bf16.msra.mxu0 0
  %547 = vmatprep.subr.bf16.mxu0 0
  %548 = vmatpush1.bf16.msra.mxu0 0
  %549 = vmatprep.subr.bf16.mxu0 0
  %550 = vmatpush1.bf16.msra.mxu0 0
  %551 = vmatprep.subr.bf16.mxu0 0
  %552 = vmatpush1.bf16.msra.mxu0 0
  %553 = vmatprep.subr.bf16.mxu0 0
  %554 = vmatpush1.bf16.msra.mxu0 0
  %555 = vmatprep.subr.bf16.mxu0 0
  %556 = vmatpush1.bf16.msra.mxu0 0
  %557 = vmatprep.mubr.bf16.mxu0 0
  %558 = vmatmul.mubr.bf16.gmra.mrb[0].mxu0 %v318
  %v559 = vpop.f32.mrb[0].mxu0
  %v560 = vadd.f32 %v74, %v559
  %v561 = vpop.f32.mrb[0].mxu0
  %v562 = vadd.f32 %v74, %v561
  %v563 = vpop.f32.mrb[0].mxu0
  %v564 = vpop.f32.mrb[0].mxu0
  %565 = vdwg.mxu0
  %566 = vmatprep.subr.bf16.mxu0 %v233
  %567 = vmatpush1.bf16.msra.mxu0 %v232
  %568 = vmatprep.subr.bf16.mxu0 %v249
  %569 = vmatpush1.bf16.msra.mxu0 %v248
  %570 = vmatprep.subr.bf16.mxu0 %v265
  %571 = vmatpush1.bf16.msra.mxu0 %v264
  %572 = vmatprep.subr.bf16.mxu0 0
  %573 = vmatpush1.bf16.msra.mxu0 0
  %574 = vmatprep.subr.bf16.mxu0 0
  %575 = vmatpush1.bf16.msra.mxu0 0
  %576 = vmatprep.subr.bf16.mxu0 0
  %577 = vmatpush1.bf16.msra.mxu0 0
  %578 = vmatprep.subr.bf16.mxu0 0
  %579 = vmatpush1.bf16.msra.mxu0 0
  %580 = vmatprep.subr.bf16.mxu0 0
  %581 = vmatpush1.bf16.msra.mxu0 0
  %582 = vmatprep.subr.bf16.mxu0 0
  %583 = vmatpush1.bf16.msra.mxu0 0
  %584 = vmatprep.subr.bf16.mxu0 0
  %585 = vmatpush1.bf16.msra.mxu0 0
  %586 = vmatprep.subr.bf16.mxu0 0
  %587 = vmatpush1.bf16.msra.mxu0 0
  %588 = vmatprep.subr.bf16.mxu0 0
  %589 = vmatpush1.bf16.msra.mxu0 0
  %590 = vmatprep.subr.bf16.mxu0 0
  %591 = vmatpush1.bf16.msra.mxu0 0
  %592 = vmatprep.subr.bf16.mxu0 0
  %593 = vmatpush1.bf16.msra.mxu0 0
  %594 = vmatprep.subr.bf16.mxu0 0
  %595 = vmatpush1.bf16.msra.mxu0 0
  %596 = vmatprep.subr.bf16.mxu0 0
  %597 = vmatpush1.bf16.msra.mxu0 0
  %598 = vmatprep.mubr.bf16.mxu0 0
  %599 = vmatmul.mubr.bf16.gmra.mrb[0].mxu0 %v318
  %v600 = vpop.f32.mrb[0].mxu0
  %v601 = vadd.f32 %v74, %v600
  %v602 = vpop.f32.mrb[0].mxu0
  %v603 = vadd.f32 %v74, %v602
  %v604 = vpop.f32.mrb[0].mxu0
  %v605 = vpop.f32.mrb[0].mxu0
  %606 = vdwg.mxu0
  %607 = vmatprep.subr.bf16.mxu0 %v235
  %608 = vmatpush1.bf16.msra.mxu0 %v234
  %609 = vmatprep.subr.bf16.mxu0 %v251
  %610 = vmatpush1.bf16.msra.mxu0 %v250
  %611 = vmatprep.subr.bf16.mxu0 %v267
  %612 = vmatpush1.bf16.msra.mxu0 %v266
  %613 = vmatprep.subr.bf16.mxu0 0
  %614 = vmatpush1.bf16.msra.mxu0 0
  %615 = vmatprep.subr.bf16.mxu0 0
  %616 = vmatpush1.bf16.msra.mxu0 0
  %617 = vmatprep.subr.bf16.mxu0 0
  %618 = vmatpush1.bf16.msra.mxu0 0
  %619 = vmatprep.subr.bf16.mxu0 0
  %620 = vmatpush1.bf16.msra.mxu0 0
  %621 = vmatprep.subr.bf16.mxu0 0
  %622 = vmatpush1.bf16.msra.mxu0 0
  %623 = vmatprep.subr.bf16.mxu0 0
  %624 = vmatpush1.bf16.msra.mxu0 0
  %625 = vmatprep.subr.bf16.mxu0 0
  %626 = vmatpush1.bf16.msra.mxu0 0
  %627 = vmatprep.subr.bf16.mxu0 0
  %628 = vmatpush1.bf16.msra.mxu0 0
  %629 = vmatprep.subr.bf16.mxu0 0
  %630 = vmatpush1.bf16.msra.mxu0 0
  %631 = vmatprep.subr.bf16.mxu0 0
  %632 = vmatpush1.bf16.msra.mxu0 0
  %633 = vmatprep.subr.bf16.mxu0 0
  %634 = vmatpush1.bf16.msra.mxu0 0
  %635 = vmatprep.subr.bf16.mxu0 0
  %636 = vmatpush1.bf16.msra.mxu0 0
  %637 = vmatprep.subr.bf16.mxu0 0
  %638 = vmatpush1.bf16.msra.mxu0 0
  %639 = vmatprep.mubr.bf16.mxu0 0
  %640 = vmatmul.mubr.bf16.gmra.mrb[0].mxu0 %v318
  %v641 = vpop.f32.mrb[0].mxu0
  %v642 = vadd.f32 %v74, %v641
  %v643 = vpop.f32.mrb[0].mxu0
  %v644 = vadd.f32 %v74, %v643
  %v645 = vpop.f32.mrb[0].mxu0
  %v646 = vpop.f32.mrb[0].mxu0
  %647 = vdwg.mxu0
  %vm648 = vcmp.gt.f32.partialorder %v355, 0.0
  %vm649 = vcmp.gt.f32.partialorder %v357, 0.0
  %vm650 = vcmp.gt.f32.partialorder %v396, 0.0
  %vm651 = vcmp.gt.f32.partialorder %v398, 0.0
  %vm652 = vcmp.gt.f32.partialorder %v437, 0.0
  %vm653 = vcmp.gt.f32.partialorder %v439, 0.0
  %vm654 = vcmp.gt.f32.partialorder %v478, 0.0
  %vm655 = vcmp.gt.f32.partialorder %v480, 0.0
  %vm656 = vcmp.gt.f32.partialorder %v519, 0.0
  %vm657 = vcmp.gt.f32.partialorder %v521, 0.0
  %vm658 = vcmp.gt.f32.partialorder %v560, 0.0
  %vm659 = vcmp.gt.f32.partialorder %v562, 0.0
  %vm660 = vcmp.gt.f32.partialorder %v601, 0.0
  %vm661 = vcmp.gt.f32.partialorder %v603, 0.0
  %vm662 = vcmp.gt.f32.partialorder %v642, 0.0
  %vm663 = vcmp.gt.f32.partialorder %v644, 0.0
  %v664 = vmul.f32 %v355, 0.2
  %v665 = vmul.f32 %v357, 0.2
  %v666 = vmul.f32 %v396, 0.2
  %v667 = vmul.f32 %v398, 0.2
  %v668 = vmul.f32 %v437, 0.2
  %v669 = vmul.f32 %v439, 0.2
  %v670 = vmul.f32 %v478, 0.2
  %v671 = vmul.f32 %v480, 0.2
  %v672 = vmul.f32 %v519, 0.2
  %v673 = vmul.f32 %v521, 0.2
  %v674 = vmul.f32 %v560, 0.2
  %v675 = vmul.f32 %v562, 0.2
  %v676 = vmul.f32 %v601, 0.2
  %v677 = vmul.f32 %v603, 0.2
  %v678 = vmul.f32 %v642, 0.2
  %v679 = vmul.f32 %v644, 0.2
  %v680 = vsel %vm648, %v355, %v664
  %v681 = vsel %vm649, %v357, %v665
  %v682 = vsel %vm650, %v396, %v666
  %v683 = vsel %vm651, %v398, %v667
  %v684 = vsel %vm652, %v437, %v668
  %v685 = vsel %vm653, %v439, %v669
  %v686 = vsel %vm654, %v478, %v670
  %v687 = vsel %vm655, %v480, %v671
  %v688 = vsel %vm656, %v519, %v672
  %v689 = vsel %vm657, %v521, %v673
  %v690 = vsel %vm658, %v560, %v674
  %v691 = vsel %vm659, %v562, %v675
  %v692 = vsel %vm660, %v601, %v676
  %v693 = vsel %vm661, %v603, %v677
  %v694 = vsel %vm662, %v642, %v678
  %v695 = vsel %vm663, %v644, %v679
  %v696 = vld [vmem:[%s3] sm:$0xff]
  %698 = vset.pattern.permute.xlu0 0
  %699 = vperm.xlu0 %698, %v696
  %v700 = vpop.permute.xlu0 %699
  %v702 = vmul.f32 %v680, %v700
  %v703 = vmul.f32 %v681, %v700
  %v704 = vmul.f32 %v682, %v700
  %v705 = vmul.f32 %v683, %v700
  %v706 = vmul.f32 %v684, %v700
  %v707 = vmul.f32 %v685, %v700
  %v708 = vmul.f32 %v686, %v700
  %v709 = vmul.f32 %v687, %v700
  %v710 = vmul.f32 %v688, %v700
  %v711 = vmul.f32 %v689, %v700
  %v712 = vmul.f32 %v690, %v700
  %v713 = vmul.f32 %v691, %v700
  %v714 = vmul.f32 %v692, %v700
  %v715 = vmul.f32 %v693, %v700
  %v716 = vmul.f32 %v694, %v700
  %v717 = vmul.f32 %v695, %v700
  %v718 = vld [vmem:[%s4] sm:$0xff]
  %720 = vset.pattern.permute.xlu0 0
  %721 = vperm.xlu0 %720, %v718
  %v722 = vpop.permute.xlu0 %721
  %v724 = vadd.f32 %v702, %v722
  %v725 = vadd.f32 %v703, %v722
  %v726 = vadd.f32 %v704, %v722
  %v727 = vadd.f32 %v705, %v722
  %v728 = vadd.f32 %v706, %v722
  %v729 = vadd.f32 %v707, %v722
  %v730 = vadd.f32 %v708, %v722
  %v731 = vadd.f32 %v709, %v722
  %v732 = vadd.f32 %v710, %v722
  %v733 = vadd.f32 %v711, %v722
  %v734 = vadd.f32 %v712, %v722
  %v735 = vadd.f32 %v713, %v722
  %v736 = vadd.f32 %v714, %v722
  %v737 = vadd.f32 %v715, %v722
  %v738 = vadd.f32 %v716, %v722
  %v739 = vadd.f32 %v717, %v722
  %740 = vst [vmem:[%s5] sm:$0xff] %v724
  %741 = vst [vmem:[%s5 + $0x8] sm:$0xff] %v725
  %742 = vst [vmem:[%s5 + $0x10] sm:$0xff] %v726
  %743 = vst [vmem:[%s5 + $0x18] sm:$0xff] %v727
  %744 = vst [vmem:[%s5 + $0x20] sm:$0xff] %v728
  %745 = vst [vmem:[%s5 + $0x28] sm:$0xff] %v729
  %746 = vst [vmem:[%s5 + $0x30] sm:$0xff] %v730
  %747 = vst [vmem:[%s5 + $0x38] sm:$0xff] %v731
  %748 = vst [vmem:[%s5 + $0x40] sm:$0xff] %v732
  %749 = vst [vmem:[%s5 + $0x48] sm:$0xff] %v733
  %750 = vst [vmem:[%s5 + $0x50] sm:$0xff] %v734
  %751 = vst [vmem:[%s5 + $0x58] sm:$0xff] %v735
  %752 = vst [vmem:[%s5 + $0x60] sm:$0xff] %v736
  %753 = vst [vmem:[%s5 + $0x68] sm:$0xff] %v737
  %754 = vst [vmem:[%s5 + $0x70] sm:$0xff] %v738
  %755 = vst [vmem:[%s5 + $0x78] sm:$0xff] %v739
  // Predicated region
  $region22: #{discriminator_forward.5} parent=0 // pred_check
    _
  $region23: #{discriminator_forward.5} parent=0 // pred_check_branch
    %757 = sbr.rel (0) target = $region25
  $region24: #{discriminator_forward.5} parent=0 // pred_region
    _
  $region25: #{discriminator_forward.5} parent=0 // pred_fallthru
    _
  // Predicated region
  $region26: #{discriminator_forward.5} parent=0 // pred_check
    _
  $region27: #{discriminator_forward.5} parent=0 // pred_check_branch
    %759 = sbr.rel (0) target = $region29
  $region28: #{discriminator_forward.5} parent=0 // pred_region
    _
  $region29: #{discriminator_forward.5} parent=0 // pred_fallthru
    _

// kernel: discriminator_forward.6
$region0: #{discriminator_forward.6}
  #allocation0 [shape = 'u32[]', space=smem, size = 0x4, offset = 0x4, fixed_abs, tag = 'smem constant byte address 0x4 - core index']
  #allocation1 [shape = 'u32[144,128]{1,0:T(1,128)}', space=vmem, size = 0x12000, scoped, tag = 'internal scratch']
  %s0 = inlined_call_operand.vmem [shape: bf16[8,128], index: 0, kind: input, shape index: {}]
  %s1 = inlined_call_operand.vmem [shape: bf16[128,512], index: 1, kind: input, shape index: {}]
  %s2 = inlined_call_operand.vmem [shape: f32[8,1], index: 2, kind: input, shape index: {}]
  %s3 = inlined_call_operand.vmem [shape: f32[8,1], index: 3, kind: input, shape index: {}]
  %s4 = inlined_call_operand.vmem [shape: f32[8,1], index: 4, kind: input, shape index: {}]
  %s5 = inlined_call_operand.vmem [shape: f32[8,512], index: 5, kind: output, shape index: {}]
  %s6 = sld [smem:[#allocation0]]
  $region30: #{discriminator_forward.6} parent=0
    _
  %s8 = ssub.s32 1, %s6
  %s9 = scalar_select 0, %s8, %s6
  // Predicated region
  $region2: #{discriminator_forward.6} parent=0 // pred_check
    _
  $region3: #{discriminator_forward.6} parent=0 // pred_check_branch
    %11 = sbr.rel (0) target = $region5
  $region4: #{discriminator_forward.6} parent=0 // pred_region
    _
  $region5: #{discriminator_forward.6} parent=0 // pred_fallthru
    _
  // Predicated region
  $region6: #{discriminator_forward.6} parent=0 // pred_check
    _
  $region7: #{discriminator_forward.6} parent=0 // pred_check_branch
    %13 = sbr.rel (0) target = $region9
  $region8: #{discriminator_forward.6} parent=0 // pred_region
    _
  $region9: #{discriminator_forward.6} parent=0 // pred_fallthru
    _
  // Predicated region
  $region10: #{discriminator_forward.6} parent=0 // pred_check
    _
  $region11: #{discriminator_forward.6} parent=0 // pred_check_branch
    %15 = sbr.rel (0) target = $region13
  $region12: #{discriminator_forward.6} parent=0 // pred_region
    _
  $region13: #{discriminator_forward.6} parent=0 // pred_fallthru
    _
  // Predicated region
  $region14: #{discriminator_forward.6} parent=0 // pred_check
    _
  $region15: #{discriminator_forward.6} parent=0 // pred_check_branch
    %17 = sbr.rel (0) target = $region17
  $region16: #{discriminator_forward.6} parent=0 // pred_region
    _
  $region17: #{discriminator_forward.6} parent=0 // pred_fallthru
    _
  // Predicated region
  $region18: #{discriminator_forward.6} parent=0 // pred_check
    _
  $region19: #{discriminator_forward.6} parent=0 // pred_check_branch
    %19 = sbr.rel (0) target = $region21
  $region20: #{discriminator_forward.6} parent=0 // pred_region
    _
  $region21: #{discriminator_forward.6} parent=0 // pred_fallthru
    _
  %v21 = vld [vmem:[%s0] sm:$0xf]
  %v22 = vld [vmem:[%s1] sm:$0xff]
  %v23 = vld [vmem:[%s1 + $0x8] sm:$0xff]
  %v24 = vld [vmem:[%s1 + $0x10] sm:$0xff]
  %v25 = vld [vmem:[%s1 + $0x18] sm:$0xff]
  %v26 = vld [vmem:[%s1 + $0x20] sm:$0xff]
  %v27 = vld [vmem:[%s1 + $0x28] sm:$0xff]
  %v28 = vld [vmem:[%s1 + $0x30] sm:$0xff]
  %v29 = vld [vmem:[%s1 + $0x38] sm:$0xff]
  %v30 = vld [vmem:[%s1 + $0x40] sm:$0xff]
  %v31 = vld [vmem:[%s1 + $0x48] sm:$0xff]
  %v32 = vld [vmem:[%s1 + $0x50] sm:$0xff]
  %v33 = vld [vmem:[%s1 + $0x58] sm:$0xff]
  %v34 = vld [vmem:[%s1 + $0x60] sm:$0xff]
  %v35 = vld [vmem:[%s1 + $0x68] sm:$0xff]
  %v36 = vld [vmem:[%s1 + $0x70] sm:$0xff]
  %v37 = vld [vmem:[%s1 + $0x78] sm:$0xff]
  %v38 = vld [vmem:[%s1 + $0x80] sm:$0xff]
  %v39 = vld [vmem:[%s1 + $0x88] sm:$0xff]
  %v40 = vld [vmem:[%s1 + $0x90] sm:$0xff]
  %v41 = vld [vmem:[%s1 + $0x98] sm:$0xff]
  %v42 = vld [vmem:[%s1 + $0xa0] sm:$0xff]
  %v43 = vld [vmem:[%s1 + $0xa8] sm:$0xff]
  %v44 = vld [vmem:[%s1 + $0xb0] sm:$0xff]
  %v45 = vld [vmem:[%s1 + $0xb8] sm:$0xff]
  %v46 = vld [vmem:[%s1 + $0xc0] sm:$0xff]
  %v47 = vld [vmem:[%s1 + $0xc8] sm:$0xff]
  %v48 = vld [vmem:[%s1 + $0xd0] sm:$0xff]
  %v49 = vld [vmem:[%s1 + $0xd8] sm:$0xff]
  %v50 = vld [vmem:[%s1 + $0xe0] sm:$0xff]
  %v51 = vld [vmem:[%s1 + $0xe8] sm:$0xff]
  %v52 = vld [vmem:[%s1 + $0xf0] sm:$0xff]
  %v53 = vld [vmem:[%s1 + $0xf8] sm:$0xff]
  %v54 = vld [vmem:[%s2] sm:$0xff]
  %56 = vset.pattern.permute.xlu0 0
  %57 = vperm.xlu0 %56, %v54
  %v58 = vpop.permute.xlu0 %57
  %v92 = vunpack.c.l.b16 %v22
  %v93 = vunpack.c.h.b16 %v22
  %v94 = vunpack.c.l.b16 %v23
  %v95 = vunpack.c.h.b16 %v23
  %v96 = vunpack.c.l.b16 %v24
  %v97 = vunpack.c.h.b16 %v24
  %v98 = vunpack.c.l.b16 %v25
  %v99 = vunpack.c.h.b16 %v25
  %v100 = vunpack.c.l.b16 %v26
  %v101 = vunpack.c.h.b16 %v26
  %v102 = vunpack.c.l.b16 %v27
  %v103 = vunpack.c.h.b16 %v27
  %v104 = vunpack.c.l.b16 %v28
  %v105 = vunpack.c.h.b16 %v28
  %v106 = vunpack.c.l.b16 %v29
  %v107 = vunpack.c.h.b16 %v29
  %v108 = vunpack.c.l.b16 %v30
  %v109 = vunpack.c.h.b16 %v30
  %v110 = vunpack.c.l.b16 %v31
  %v111 = vunpack.c.h.b16 %v31
  %v112 = vunpack.c.l.b16 %v32
  %v113 = vunpack.c.h.b16 %v32
  %v114 = vunpack.c.l.b16 %v33
  %v115 = vunpack.c.h.b16 %v33
  %v116 = vunpack.c.l.b16 %v34
  %v117 = vunpack.c.h.b16 %v34
  %v118 = vunpack.c.l.b16 %v35
  %v119 = vunpack.c.h.b16 %v35
  %v120 = vunpack.c.l.b16 %v36
  %v121 = vunpack.c.h.b16 %v36
  %v122 = vunpack.c.l.b16 %v37
  %v123 = vunpack.c.h.b16 %v37
  %v124 = vunpack.c.l.b16 %v38
  %v125 = vunpack.c.h.b16 %v38
  %v126 = vunpack.c.l.b16 %v39
  %v127 = vunpack.c.h.b16 %v39
  %v128 = vunpack.c.l.b16 %v40
  %v129 = vunpack.c.h.b16 %v40
  %v130 = vunpack.c.l.b16 %v41
  %v131 = vunpack.c.h.b16 %v41
  %v132 = vunpack.c.l.b16 %v42
  %v133 = vunpack.c.h.b16 %v42
  %v134 = vunpack.c.l.b16 %v43
  %v135 = vunpack.c.h.b16 %v43
  %v136 = vunpack.c.l.b16 %v44
  %v137 = vunpack.c.h.b16 %v44
  %v138 = vunpack.c.l.b16 %v45
  %v139 = vunpack.c.h.b16 %v45
  %v140 = vunpack.c.l.b16 %v46
  %v141 = vunpack.c.h.b16 %v46
  %v142 = vunpack.c.l.b16 %v47
  %v143 = vunpack.c.h.b16 %v47
  %v144 = vunpack.c.l.b16 %v48
  %v145 = vunpack.c.h.b16 %v48
  %v146 = vunpack.c.l.b16 %v49
  %v147 = vunpack.c.h.b16 %v49
  %v148 = vunpack.c.l.b16 %v50
  %v149 = vunpack.c.h.b16 %v50
  %v150 = vunpack.c.l.b16 %v51
  %v151 = vunpack.c.h.b16 %v51
  %v152 = vunpack.c.l.b16 %v52
  %v153 = vunpack.c.h.b16 %v52
  %v154 = vunpack.c.l.b16 %v53
  %v155 = vunpack.c.h.b16 %v53
  %v156 = vpack.c.b16 %v96, %v92
  %v157 = vpack.c.b16 %v97, %v93
  %v158 = vpack.c.b16 %v98, %v94
  %v159 = vpack.c.b16 %v99, %v95
  %v160 = vpack.c.b16 %v104, %v100
  %v161 = vpack.c.b16 %v105, %v101
  %v162 = vpack.c.b16 %v106, %v102
  %v163 = vpack.c.b16 %v107, %v103
  %v164 = vpack.c.b16 %v112, %v108
  %v165 = vpack.c.b16 %v113, %v109
  %v166 = vpack.c.b16 %v114, %v110
  %v167 = vpack.c.b16 %v115, %v111
  %v168 = vpack.c.b16 %v120, %v116
  %v169 = vpack.c.b16 %v121, %v117
  %v170 = vpack.c.b16 %v122, %v118
  %v171 = vpack.c.b16 %v123, %v119
  %v172 = vpack.c.b16 %v128, %v124
  %v173 = vpack.c.b16 %v129, %v125
  %v174 = vpack.c.b16 %v130, %v126
  %v175 = vpack.c.b16 %v131, %v127
  %v176 = vpack.c.b16 %v136, %v132
  %v177 = vpack.c.b16 %v137, %v133
  %v178 = vpack.c.b16 %v138, %v134
  %v179 = vpack.c.b16 %v139, %v135
  %v180 = vpack.c.b16 %v144, %v140
  %v181 = vpack.c.b16 %v145, %v141
  %v182 = vpack.c.b16 %v146, %v142
  %v183 = vpack.c.b16 %v147, %v143
  %v184 = vpack.c.b16 %v152, %v148
  %v185 = vpack.c.b16 %v153, %v149
  %v186 = vpack.c.b16 %v154, %v150
  %v187 = vpack.c.b16 %v155, %v151
  %220 = vmatprep.subr.bf16.mxu0 %v157
  %221 = vmatpush1.bf16.msra.mxu0 %v156
  %222 = vmatprep.subr.bf16.mxu0 %v161
  %223 = vmatpush1.bf16.msra.mxu0 %v160
  %224 = vmatprep.subr.bf16.mxu0 %v165
  %225 = vmatpush1.bf16.msra.mxu0 %v164
  %226 = vmatprep.subr.bf16.mxu0 %v169
  %227 = vmatpush1.bf16.msra.mxu0 %v168
  %228 = vmatprep.subr.bf16.mxu0 %v173
  %229 = vmatpush1.bf16.msra.mxu0 %v172
  %230 = vmatprep.subr.bf16.mxu0 %v177
  %231 = vmatpush1.bf16.msra.mxu0 %v176
  %232 = vmatprep.subr.bf16.mxu0 %v181
  %233 = vmatpush1.bf16.msra.mxu0 %v180
  %234 = vmatprep.subr.bf16.mxu0 %v185
  %235 = vmatpush1.bf16.msra.mxu0 %v184
  %236 = vmatprep.subr.bf16.mxu0 0
  %237 = vmatpush1.bf16.msra.mxu0 0
  %238 = vmatprep.subr.bf16.mxu0 0
  %239 = vmatpush1.bf16.msra.mxu0 0
  %240 = vmatprep.subr.bf16.mxu0 0
  %241 = vmatpush1.bf16.msra.mxu0 0
  %242 = vmatprep.subr.bf16.mxu0 0
  %243 = vmatpush1.bf16.msra.mxu0 0
  %244 = vmatprep.subr.bf16.mxu0 0
  %245 = vmatpush1.bf16.msra.mxu0 0
  %246 = vmatprep.subr.bf16.mxu0 0
  %247 = vmatpush1.bf16.msra.mxu0 0
  %248 = vmatprep.subr.bf16.mxu0 0
  %249 = vmatpush1.bf16.msra.mxu0 0
  %250 = vmatprep.subr.bf16.mxu0 0
  %251 = vmatpush1.bf16.msra.mxu0 0
  %252 = vmatprep.mubr.bf16.mxu0 0
  %253 = vmatmul.mubr.bf16.gmra.mrb[0].mxu0 %v21
  %v254 = vpop.f32.mrb[0].mxu0
  %v255 = vadd.f32 %v58, %v254
  %v256 = vpop.f32.mrb[0].mxu0
  %v257 = vadd.f32 %v58, %v256
  %v258 = vpop.f32.mrb[0].mxu0
  %v259 = vpop.f32.mrb[0].mxu0
  %260 = vdwg.mxu0
  %261 = vmatprep.subr.bf16.mxu0 %v159
  %262 = vmatpush1.bf16.msra.mxu0 %v158
  %263 = vmatprep.subr.bf16.mxu0 %v163
  %264 = vmatpush1.bf16.msra.mxu0 %v162
  %265 = vmatprep.subr.bf16.mxu0 %v167
  %266 = vmatpush1.bf16.msra.mxu0 %v166
  %267 = vmatprep.subr.bf16.mxu0 %v171
  %268 = vmatpush1.bf16.msra.mxu0 %v170
  %269 = vmatprep.subr.bf16.mxu0 %v175
  %270 = vmatpush1.bf16.msra.mxu0 %v174
  %271 = vmatprep.subr.bf16.mxu0 %v179
  %272 = vmatpush1.bf16.msra.mxu0 %v178
  %273 = vmatprep.subr.bf16.mxu0 %v183
  %274 = vmatpush1.bf16.msra.mxu0 %v182
  %275 = vmatprep.subr.bf16.mxu0 %v187
  %276 = vmatpush1.bf16.msra.mxu0 %v186
  %277 = vmatprep.subr.bf16.mxu0 0
  %278 = vmatpush1.bf16.msra.mxu0 0
  %279 = vmatprep.subr.bf16.mxu0 0
  %280 = vmatpush1.bf16.msra.mxu0 0
  %281 = vmatprep.subr.bf16.mxu0 0
  %282 = vmatpush1.bf16.msra.mxu0 0
  %283 = vmatprep.subr.bf16.mxu0 0
  %284 = vmatpush1.bf16.msra.mxu0 0
  %285 = vmatprep.subr.bf16.mxu0 0
  %286 = vmatpush1.bf16.msra.mxu0 0
  %287 = vmatprep.subr.bf16.mxu0 0
  %288 = vmatpush1.bf16.msra.mxu0 0
  %289 = vmatprep.subr.bf16.mxu0 0
  %290 = vmatpush1.bf16.msra.mxu0 0
  %291 = vmatprep.subr.bf16.mxu0 0
  %292 = vmatpush1.bf16.msra.mxu0 0
  %293 = vmatprep.mubr.bf16.mxu0 0
  %294 = vmatmul.mubr.bf16.gmra.mrb[0].mxu0 %v21
  %v295 = vpop.f32.mrb[0].mxu0
  %v296 = vadd.f32 %v58, %v295
  %v297 = vpop.f32.mrb[0].mxu0
  %v298 = vadd.f32 %v58, %v297
  %v299 = vpop.f32.mrb[0].mxu0
  %v300 = vpop.f32.mrb[0].mxu0
  %301 = vdwg.mxu0
  %vm302 = vcmp.gt.f32.partialorder %v255, 0.0
  %vm303 = vcmp.gt.f32.partialorder %v257, 0.0
  %vm304 = vcmp.gt.f32.partialorder %v296, 0.0
  %vm305 = vcmp.gt.f32.partialorder %v298, 0.0
  %v306 = vmul.f32 %v255, 0.2
  %v307 = vmul.f32 %v257, 0.2
  %v308 = vmul.f32 %v296, 0.2
  %v309 = vmul.f32 %v298, 0.2
  %v310 = vsel %vm302, %v255, %v306
  %v311 = vsel %vm303, %v257, %v307
  %v312 = vsel %vm304, %v296, %v308
  %v313 = vsel %vm305, %v298, %v309
  %v314 = vld [vmem:[%s3] sm:$0xff]
  %316 = vset.pattern.permute.xlu0 0
  %317 = vperm.xlu0 %316, %v314
  %v318 = vpop.permute.xlu0 %317
  %v320 = vmul.f32 %v310, %v318
  %v321 = vmul.f32 %v311, %v318
  %v322 = vmul.f32 %v312, %v318
  %v323 = vmul.f32 %v313, %v318
  %v324 = vld [vmem:[%s4] sm:$0xff]
  %326 = vset.pattern.permute.xlu0 0
  %327 = vperm.xlu0 %326, %v324
  %v328 = vpop.permute.xlu0 %327
  %v330 = vadd.f32 %v320, %v328
  %v331 = vadd.f32 %v321, %v328
  %v332 = vadd.f32 %v322, %v328
  %v333 = vadd.f32 %v323, %v328
  %334 = vst [vmem:[%s5] sm:$0xff] %v330
  %335 = vst [vmem:[%s5 + $0x8] sm:$0xff] %v331
  %336 = vst [vmem:[%s5 + $0x10] sm:$0xff] %v332
  %337 = vst [vmem:[%s5 + $0x18] sm:$0xff] %v333
  // Predicated region
  $region22: #{discriminator_forward.6} parent=0 // pred_check
    _
  $region23: #{discriminator_forward.6} parent=0 // pred_check_branch
    %339 = sbr.rel (0) target = $region25
  $region24: #{discriminator_forward.6} parent=0 // pred_region
    _
  $region25: #{discriminator_forward.6} parent=0 // pred_fallthru
    _
  // Predicated region
  $region26: #{discriminator_forward.6} parent=0 // pred_check
    _
  $region27: #{discriminator_forward.6} parent=0 // pred_check_branch
    %341 = sbr.rel (0) target = $region29
  $region28: #{discriminator_forward.6} parent=0 // pred_region
    _
  $region29: #{discriminator_forward.6} parent=0 // pred_fallthru
    _

// kernel: discriminator_forward.7
$region0: #{discriminator_forward.7}
  #allocation0 [shape = 'u32[]', space=smem, size = 0x4, offset = 0x4, fixed_abs, tag = 'smem constant byte address 0x4 - core index']
  #allocation1 [shape = 'u32[144,128]{1,0:T(1,128)}', space=vmem, size = 0x12000, scoped, tag = 'internal scratch']
  %s0 = inlined_call_operand.vmem [shape: bf16[16,128], index: 0, kind: input, shape index: {}]
  %s1 = inlined_call_operand.vmem [shape: bf16[128,128], index: 1, kind: input, shape index: {}]
  %s2 = inlined_call_operand.vmem [shape: f32[16,1], index: 2, kind: input, shape index: {}]
  %s3 = inlined_call_operand.vmem [shape: f32[16,1], index: 3, kind: input, shape index: {}]
  %s4 = inlined_call_operand.vmem [shape: f32[16,1], index: 4, kind: input, shape index: {}]
  %s5 = inlined_call_operand.vmem [shape: f32[16,128], index: 5, kind: output, shape index: {}]
  %s6 = sld [smem:[#allocation0]]
  $region30: #{discriminator_forward.7} parent=0
    _
  %s8 = ssub.s32 1, %s6
  %s9 = scalar_select 0, %s8, %s6
  // Predicated region
  $region2: #{discriminator_forward.7} parent=0 // pred_check
    _
  $region3: #{discriminator_forward.7} parent=0 // pred_check_branch
    %11 = sbr.rel (0) target = $region5
  $region4: #{discriminator_forward.7} parent=0 // pred_region
    _
  $region5: #{discriminator_forward.7} parent=0 // pred_fallthru
    _
  // Predicated region
  $region6: #{discriminator_forward.7} parent=0 // pred_check
    _
  $region7: #{discriminator_forward.7} parent=0 // pred_check_branch
    %13 = sbr.rel (0) target = $region9
  $region8: #{discriminator_forward.7} parent=0 // pred_region
    _
  $region9: #{discriminator_forward.7} parent=0 // pred_fallthru
    _
  // Predicated region
  $region10: #{discriminator_forward.7} parent=0 // pred_check
    _
  $region11: #{discriminator_forward.7} parent=0 // pred_check_branch
    %15 = sbr.rel (0) target = $region13
  $region12: #{discriminator_forward.7} parent=0 // pred_region
    _
  $region13: #{discriminator_forward.7} parent=0 // pred_fallthru
    _
  // Predicated region
  $region14: #{discriminator_forward.7} parent=0 // pred_check
    _
  $region15: #{discriminator_forward.7} parent=0 // pred_check_branch
    %17 = sbr.rel (0) target = $region17
  $region16: #{discriminator_forward.7} parent=0 // pred_region
    _
  $region17: #{discriminator_forward.7} parent=0 // pred_fallthru
    _
  // Predicated region
  $region18: #{discriminator_forward.7} parent=0 // pred_check
    _
  $region19: #{discriminator_forward.7} parent=0 // pred_check_branch
    %19 = sbr.rel (0) target = $region21
  $region20: #{discriminator_forward.7} parent=0 // pred_region
    _
  $region21: #{discriminator_forward.7} parent=0 // pred_fallthru
    _
  %v21 = vld [vmem:[%s0] sm:$0xf]
  %v22 = vld [vmem:[%s0 + $0x4] sm:$0xf]
  %v23 = vld [vmem:[%s1] sm:$0xf]
  %v24 = vld [vmem:[%s1 + $0x4] sm:$0xf]
  %v25 = vld [vmem:[%s1 + $0x8] sm:$0xf]
  %v26 = vld [vmem:[%s1 + $0xc] sm:$0xf]
  %v27 = vld [vmem:[%s1 + $0x10] sm:$0xf]
  %v28 = vld [vmem:[%s1 + $0x14] sm:$0xf]
  %v29 = vld [vmem:[%s1 + $0x18] sm:$0xf]
  %v30 = vld [vmem:[%s1 + $0x1c] sm:$0xf]
  %v31 = vld [vmem:[%s1 + $0x20] sm:$0xf]
  %v32 = vld [vmem:[%s1 + $0x24] sm:$0xf]
  %v33 = vld [vmem:[%s1 + $0x28] sm:$0xf]
  %v34 = vld [vmem:[%s1 + $0x2c] sm:$0xf]
  %v35 = vld [vmem:[%s1 + $0x30] sm:$0xf]
  %v36 = vld [vmem:[%s1 + $0x34] sm:$0xf]
  %v37 = vld [vmem:[%s1 + $0x38] sm:$0xf]
  %v38 = vld [vmem:[%s1 + $0x3c] sm:$0xf]
  %v39 = vld [vmem:[%s2] sm:$0xff]
  %v40 = vld [vmem:[%s2 + $0x8] sm:$0xff]
  %42 = vset.pattern.permute.xlu0 0
  %43 = vperm.xlu0 %42, %v39
  %v44 = vpop.permute.xlu0 %43
  %47 = vset.pattern.permute.xlu0 0
  %48 = vperm.xlu0 %47, %v40
  %v49 = vpop.permute.xlu0 %48
  %v53 = vunpack.c.l.b16 %v21
  %v54 = vunpack.c.l.b16 %v22
  %v55 = vpack.c.b16 %v54, %v53
  %v73 = vunpack.c.l.b16 %v23
  %v74 = vunpack.c.l.b16 %v24
  %v75 = vunpack.c.l.b16 %v25
  %v76 = vunpack.c.l.b16 %v26
  %v77 = vunpack.c.l.b16 %v27
  %v78 = vunpack.c.l.b16 %v28
  %v79 = vunpack.c.l.b16 %v29
  %v80 = vunpack.c.l.b16 %v30
  %v81 = vunpack.c.l.b16 %v31
  %v82 = vunpack.c.l.b16 %v32
  %v83 = vunpack.c.l.b16 %v33
  %v84 = vunpack.c.l.b16 %v34
  %v85 = vunpack.c.l.b16 %v35
  %v86 = vunpack.c.l.b16 %v36
  %v87 = vunpack.c.l.b16 %v37
  %v88 = vunpack.c.l.b16 %v38
  %v89 = vpack.c.b16 %v74, %v73
  %v90 = vpack.c.b16 %v76, %v75
  %v91 = vpack.c.b16 %v78, %v77
  %v92 = vpack.c.b16 %v80, %v79
  %v93 = vpack.c.b16 %v82, %v81
  %v94 = vpack.c.b16 %v84, %v83
  %v95 = vpack.c.b16 %v86, %v85
  %v96 = vpack.c.b16 %v88, %v87
  %105 = vmatprep.subr.bf16.mxu0 0
  %106 = vmatpush1.bf16.msra.mxu0 %v89
  %107 = vmatprep.subr.bf16.mxu0 0
  %108 = vmatpush1.bf16.msra.mxu0 %v90
  %109 = vmatprep.subr.bf16.mxu0 0
  %110 = vmatpush1.bf16.msra.mxu0 %v91
  %111 = vmatprep.subr.bf16.mxu0 0
  %112 = vmatpush1.bf16.msra.mxu0 %v92
  %113 = vmatprep.subr.bf16.mxu0 0
  %114 = vmatpush1.bf16.msra.mxu0 %v93
  %115 = vmatprep.subr.bf16.mxu0 0
  %116 = vmatpush1.bf16.msra.mxu0 %v94
  %117 = vmatprep.subr.bf16.mxu0 0
  %118 = vmatpush1.bf16.msra.mxu0 %v95
  %119 = vmatprep.subr.bf16.mxu0 0
  %120 = vmatpush1.bf16.msra.mxu0 %v96
  %121 = vmatprep.subr.bf16.mxu0 0
  %122 = vmatpush1.bf16.msra.mxu0 0
  %123 = vmatprep.subr.bf16.mxu0 0
  %124 = vmatpush1.bf16.msra.mxu0 0
  %125 = vmatprep.subr.bf16.mxu0 0
  %126 = vmatpush1.bf16.msra.mxu0 0
  %127 = vmatprep.subr.bf16.mxu0 0
  %128 = vmatpush1.bf16.msra.mxu0 0
  %129 = vmatprep.subr.bf16.mxu0 0
  %130 = vmatpush1.bf16.msra.mxu0 0
  %131 = vmatprep.subr.bf16.mxu0 0
  %132 = vmatpush1.bf16.msra.mxu0 0
  %133 = vmatprep.subr.bf16.mxu0 0
  %134 = vmatpush1.bf16.msra.mxu0 0
  %135 = vmatprep.subr.bf16.mxu0 0
  %136 = vmatpush1.bf16.msra.mxu0 0
  %137 = vmatprep.mubr.bf16.mxu0 0
  %138 = vmatmul.mubr.bf16.gmra.mrb[0].mxu0 %v55
  %v139 = vpop.f32.mrb[0].mxu0
  %v140 = vadd.f32 %v44, %v139
  %v141 = vpop.f32.mrb[0].mxu0
  %v142 = vpop.f32.mrb[0].mxu0
  %v143 = vadd.f32 %v49, %v142
  %v144 = vpop.f32.mrb[0].mxu0
  %145 = vdwg.mxu0
  %vm146 = vcmp.gt.f32.partialorder %v140, 0.0
  %vm147 = vcmp.gt.f32.partialorder %v143, 0.0
  %v148 = vmul.f32 %v140, 0.2
  %v149 = vmul.f32 %v143, 0.2
  %v150 = vsel %vm146, %v140, %v148
  %v151 = vsel %vm147, %v143, %v149
  %v152 = vld [vmem:[%s3] sm:$0xff]
  %v153 = vld [vmem:[%s3 + $0x8] sm:$0xff]
  %155 = vset.pattern.permute.xlu0 0
  %156 = vperm.xlu0 %155, %v152
  %v157 = vpop.permute.xlu0 %156
  %160 = vset.pattern.permute.xlu0 0
  %161 = vperm.xlu0 %160, %v153
  %v162 = vpop.permute.xlu0 %161
  %v164 = vmul.f32 %v150, %v157
  %v165 = vmul.f32 %v151, %v162
  %v166 = vld [vmem:[%s4] sm:$0xff]
  %v167 = vld [vmem:[%s4 + $0x8] sm:$0xff]
  %169 = vset.pattern.permute.xlu0 0
  %170 = vperm.xlu0 %169, %v166
  %v171 = vpop.permute.xlu0 %170
  %174 = vset.pattern.permute.xlu0 0
  %175 = vperm.xlu0 %174, %v167
  %v176 = vpop.permute.xlu0 %175
  %v178 = vadd.f32 %v164, %v171
  %v179 = vadd.f32 %v165, %v176
  %180 = vst [vmem:[%s5] sm:$0xff] %v178
  %181 = vst [vmem:[%s5 + $0x8] sm:$0xff] %v179
  // Predicated region
  $region22: #{discriminator_forward.7} parent=0 // pred_check
    _
  $region23: #{discriminator_forward.7} parent=0 // pred_check_branch
    %183 = sbr.rel (0) target = $region25
  $region24: #{discriminator_forward.7} parent=0 // pred_region
    _
  $region25: #{discriminator_forward.7} parent=0 // pred_fallthru
    _
  // Predicated region
  $region26: #{discriminator_forward.7} parent=0 // pred_check
    _
  $region27: #{discriminator_forward.7} parent=0 // pred_check_branch
    %185 = sbr.rel (0) target = $region29
  $region28: #{discriminator_forward.7} parent=0 // pred_region
    _
  $region29: #{discriminator_forward.7} parent=0 // pred_fallthru
    _

// kernel: discriminator_forward.8
$region0: #{discriminator_forward.8}
  #allocation0 [shape = 'u32[]', space=smem, size = 0x4, offset = 0x4, fixed_abs, tag = 'smem constant byte address 0x4 - core index']
  #allocation1 [shape = 'u32[144,128]{1,0:T(1,128)}', space=vmem, size = 0x12000, scoped, tag = 'internal scratch']
  %s0 = inlined_call_operand.vmem [shape: bf16[32,256], index: 0, kind: input, shape index: {}]
  %s1 = inlined_call_operand.vmem [shape: bf16[256,32], index: 1, kind: input, shape index: {}]
  %s2 = inlined_call_operand.vmem [shape: f32[32,1], index: 2, kind: input, shape index: {}]
  %s3 = inlined_call_operand.vmem [shape: f32[32,1], index: 3, kind: input, shape index: {}]
  %s4 = inlined_call_operand.vmem [shape: f32[32,1], index: 4, kind: input, shape index: {}]
  %s5 = inlined_call_operand.vmem [shape: f32[32,32], index: 5, kind: output, shape index: {}]
  %s6 = sld [smem:[#allocation0]]
  $region30: #{discriminator_forward.8} parent=0
    _
  %s8 = ssub.s32 1, %s6
  %s9 = scalar_select 0, %s8, %s6
  // Predicated region
  $region2: #{discriminator_forward.8} parent=0 // pred_check
    _
  $region3: #{discriminator_forward.8} parent=0 // pred_check_branch
    %11 = sbr.rel (0) target = $region5
  $region4: #{discriminator_forward.8} parent=0 // pred_region
    _
  $region5: #{discriminator_forward.8} parent=0 // pred_fallthru
    _
  // Predicated region
  $region6: #{discriminator_forward.8} parent=0 // pred_check
    _
  $region7: #{discriminator_forward.8} parent=0 // pred_check_branch
    %13 = sbr.rel (0) target = $region9
  $region8: #{discriminator_forward.8} parent=0 // pred_region
    _
  $region9: #{discriminator_forward.8} parent=0 // pred_fallthru
    _
  // Predicated region
  $region10: #{discriminator_forward.8} parent=0 // pred_check
    _
  $region11: #{discriminator_forward.8} parent=0 // pred_check_branch
    %15 = sbr.rel (0) target = $region13
  $region12: #{discriminator_forward.8} parent=0 // pred_region
    _
  $region13: #{discriminator_forward.8} parent=0 // pred_fallthru
    _
  // Predicated region
  $region14: #{discriminator_forward.8} parent=0 // pred_check
    _
  $region15: #{discriminator_forward.8} parent=0 // pred_check_branch
    %17 = sbr.rel (0) target = $region17
  $region16: #{discriminator_forward.8} parent=0 // pred_region
    _
  $region17: #{discriminator_forward.8} parent=0 // pred_fallthru
    _
  // Predicated region
  $region18: #{discriminator_forward.8} parent=0 // pred_check
    _
  $region19: #{discriminator_forward.8} parent=0 // pred_check_branch
    %19 = sbr.rel (0) target = $region21
  $region20: #{discriminator_forward.8} parent=0 // pred_region
    _
  $region21: #{discriminator_forward.8} parent=0 // pred_fallthru
    _
  %v21 = vld [vmem:[%s0] sm:$0xff]
  %v22 = vld [vmem:[%s0 + $0x8] sm:$0xff]
  %v23 = vld [vmem:[%s0 + $0x10] sm:$0xff]
  %v24 = vld [vmem:[%s0 + $0x18] sm:$0xff]
  %v25 = vld [vmem:[%s1] sm:$0xf]
  %v26 = vld [vmem:[%s1 + $0x4] sm:$0xf]
  %v27 = vld [vmem:[%s1 + $0x8] sm:$0xf]
  %v28 = vld [vmem:[%s1 + $0xc] sm:$0xf]
  %v29 = vld [vmem:[%s1 + $0x10] sm:$0xf]
  %v30 = vld [vmem:[%s1 + $0x14] sm:$0xf]
  %v31 = vld [vmem:[%s1 + $0x18] sm:$0xf]
  %v32 = vld [vmem:[%s1 + $0x1c] sm:$0xf]
  %v33 = vld [vmem:[%s1 + $0x20] sm:$0xf]
  %v34 = vld [vmem:[%s1 + $0x24] sm:$0xf]
  %v35 = vld [vmem:[%s1 + $0x28] sm:$0xf]
  %v36 = vld [vmem:[%s1 + $0x2c] sm:$0xf]
  %v37 = vld [vmem:[%s1 + $0x30] sm:$0xf]
  %v38 = vld [vmem:[%s1 + $0x34] sm:$0xf]
  %v39 = vld [vmem:[%s1 + $0x38] sm:$0xf]
  %v40 = vld [vmem:[%s1 + $0x3c] sm:$0xf]
  %v41 = vld [vmem:[%s1 + $0x40] sm:$0xf]
  %v42 = vld [vmem:[%s1 + $0x44] sm:$0xf]
  %v43 = vld [vmem:[%s1 + $0x48] sm:$0xf]
  %v44 = vld [vmem:[%s1 + $0x4c] sm:$0xf]
  %v45 = vld [vmem:[%s1 + $0x50] sm:$0xf]
  %v46 = vld [vmem:[%s1 + $0x54] sm:$0xf]
  %v47 = vld [vmem:[%s1 + $0x58] sm:$0xf]
  %v48 = vld [vmem:[%s1 + $0x5c] sm:$0xf]
  %v49 = vld [vmem:[%s1 + $0x60] sm:$0xf]
  %v50 = vld [vmem:[%s1 + $0x64] sm:$0xf]
  %v51 = vld [vmem:[%s1 + $0x68] sm:$0xf]
  %v52 = vld [vmem:[%s1 + $0x6c] sm:$0xf]
  %v53 = vld [vmem:[%s1 + $0x70] sm:$0xf]
  %v54 = vld [vmem:[%s1 + $0x74] sm:$0xf]
  %v55 = vld [vmem:[%s1 + $0x78] sm:$0xf]
  %v56 = vld [vmem:[%s1 + $0x7c] sm:$0xf]
  %v57 = vld [vmem:[%s2] sm:$0xff]
  %v58 = vld [vmem:[%s2 + $0x8] sm:$0xff]
  %v59 = vld [vmem:[%s2 + $0x10] sm:$0xff]
  %v60 = vld [vmem:[%s2 + $0x18] sm:$0xff]
  %62 = vset.pattern.permute.xlu0 0
  %63 = vperm.xlu0 %62, %v57
  %v64 = vpop.permute.xlu0 %63
  %67 = vset.pattern.permute.xlu0 0
  %68 = vperm.xlu0 %67, %v58
  %v69 = vpop.permute.xlu0 %68
  %72 = vset.pattern.permute.xlu0 0
  %73 = vperm.xlu0 %72, %v59
  %v74 = vpop.permute.xlu0 %73
  %77 = vset.pattern.permute.xlu0 0
  %78 = vperm.xlu0 %77, %v60
  %v79 = vpop.permute.xlu0 %78
  %v85 = vunpack.c.l.b16 %v21
  %v86 = vunpack.c.h.b16 %v21
  %v87 = vunpack.c.l.b16 %v22
  %v88 = vunpack.c.h.b16 %v22
  %v89 = vunpack.c.l.b16 %v23
  %v90 = vunpack.c.h.b16 %v23
  %v91 = vunpack.c.l.b16 %v24
  %v92 = vunpack.c.h.b16 %v24
  %v93 = vpack.c.b16 %v87, %v85
  %v94 = vpack.c.b16 %v88, %v86
  %v95 = vpack.c.b16 %v91, %v89
  %v96 = vpack.c.b16 %v92, %v90
  %v133 = vunpack.c.l.b16 %v25
  %v134 = vunpack.c.l.b16 %v26
  %v135 = vunpack.c.l.b16 %v27
  %v136 = vunpack.c.l.b16 %v28
  %v137 = vunpack.c.l.b16 %v29
  %v138 = vunpack.c.l.b16 %v30
  %v139 = vunpack.c.l.b16 %v31
  %v140 = vunpack.c.l.b16 %v32
  %v141 = vunpack.c.l.b16 %v33
  %v142 = vunpack.c.l.b16 %v34
  %v143 = vunpack.c.l.b16 %v35
  %v144 = vunpack.c.l.b16 %v36
  %v145 = vunpack.c.l.b16 %v37
  %v146 = vunpack.c.l.b16 %v38
  %v147 = vunpack.c.l.b16 %v39
  %v148 = vunpack.c.l.b16 %v40
  %v149 = vunpack.c.l.b16 %v41
  %v150 = vunpack.c.l.b16 %v42
  %v151 = vunpack.c.l.b16 %v43
  %v152 = vunpack.c.l.b16 %v44
  %v153 = vunpack.c.l.b16 %v45
  %v154 = vunpack.c.l.b16 %v46
  %v155 = vunpack.c.l.b16 %v47
  %v156 = vunpack.c.l.b16 %v48
  %v157 = vunpack.c.l.b16 %v49
  %v158 = vunpack.c.l.b16 %v50
  %v159 = vunpack.c.l.b16 %v51
  %v160 = vunpack.c.l.b16 %v52
  %v161 = vunpack.c.l.b16 %v53
  %v162 = vunpack.c.l.b16 %v54
  %v163 = vunpack.c.l.b16 %v55
  %v164 = vunpack.c.l.b16 %v56
  %v165 = vpack.c.b16 %v134, %v133
  %v166 = vpack.c.b16 %v136, %v135
  %v167 = vpack.c.b16 %v138, %v137
  %v168 = vpack.c.b16 %v140, %v139
  %v169 = vpack.c.b16 %v142, %v141
  %v170 = vpack.c.b16 %v144, %v143
  %v171 = vpack.c.b16 %v146, %v145
  %v172 = vpack.c.b16 %v148, %v147
  %v173 = vpack.c.b16 %v150, %v149
  %v174 = vpack.c.b16 %v152, %v151
  %v175 = vpack.c.b16 %v154, %v153
  %v176 = vpack.c.b16 %v156, %v155
  %v177 = vpack.c.b16 %v158, %v157
  %v178 = vpack.c.b16 %v160, %v159
  %v179 = vpack.c.b16 %v162, %v161
  %v180 = vpack.c.b16 %v164, %v163
  %197 = vmatprep.subr.bf16.mxu0 0
  %198 = vmatpush1.bf16.msra.mxu0 %v165
  %199 = vmatprep.subr.bf16.mxu0 0
  %200 = vmatpush1.bf16.msra.mxu0 %v166
  %201 = vmatprep.subr.bf16.mxu0 0
  %202 = vmatpush1.bf16.msra.mxu0 %v167
  %203 = vmatprep.subr.bf16.mxu0 0
  %204 = vmatpush1.bf16.msra.mxu0 %v168
  %205 = vmatprep.subr.bf16.mxu0 0
  %206 = vmatpush1.bf16.msra.mxu0 %v169
  %207 = vmatprep.subr.bf16.mxu0 0
  %208 = vmatpush1.bf16.msra.mxu0 %v170
  %209 = vmatprep.subr.bf16.mxu0 0
  %210 = vmatpush1.bf16.msra.mxu0 %v171
  %211 = vmatprep.subr.bf16.mxu0 0
  %212 = vmatpush1.bf16.msra.mxu0 %v172
  %213 = vmatprep.subr.bf16.mxu0 0
  %214 = vmatpush1.bf16.msra.mxu0 %v173
  %215 = vmatprep.subr.bf16.mxu0 0
  %216 = vmatpush1.bf16.msra.mxu0 %v174
  %217 = vmatprep.subr.bf16.mxu0 0
  %218 = vmatpush1.bf16.msra.mxu0 %v175
  %219 = vmatprep.subr.bf16.mxu0 0
  %220 = vmatpush1.bf16.msra.mxu0 %v176
  %221 = vmatprep.subr.bf16.mxu0 0
  %222 = vmatpush1.bf16.msra.mxu0 %v177
  %223 = vmatprep.subr.bf16.mxu0 0
  %224 = vmatpush1.bf16.msra.mxu0 %v178
  %225 = vmatprep.subr.bf16.mxu0 0
  %226 = vmatpush1.bf16.msra.mxu0 %v179
  %227 = vmatprep.subr.bf16.mxu0 0
  %228 = vmatpush1.bf16.msra.mxu0 %v180
  %229 = vmatprep.mubr.bf16.mxu0 %v94
  %230 = vmatmul.mubr.bf16.gmra.mrb[0].mxu0 %v93
  %v231 = vpop.f32.mrb[0].mxu0
  %v232 = vadd.f32 %v64, %v231
  %v233 = vpop.f32.mrb[0].mxu0
  %v234 = vpop.f32.mrb[0].mxu0
  %v235 = vadd.f32 %v69, %v234
  %v236 = vpop.f32.mrb[0].mxu0
  %237 = vmatprep.mubr.bf16.mxu0 %v96
  %238 = vmatmul.mubr.bf16.gmra.mrb[0].mxu0 %v95
  %v239 = vpop.f32.mrb[0].mxu0
  %v240 = vadd.f32 %v74, %v239
  %v241 = vpop.f32.mrb[0].mxu0
  %v242 = vpop.f32.mrb[0].mxu0
  %v243 = vadd.f32 %v79, %v242
  %v244 = vpop.f32.mrb[0].mxu0
  %245 = vdwg.mxu0
  %vm246 = vcmp.gt.f32.partialorder %v232, 0.0
  %vm247 = vcmp.gt.f32.partialorder %v235, 0.0
  %vm248 = vcmp.gt.f32.partialorder %v240, 0.0
  %vm249 = vcmp.gt.f32.partialorder %v243, 0.0
  %v250 = vmul.f32 %v232, 0.2
  %v251 = vmul.f32 %v235, 0.2
  %v252 = vmul.f32 %v240, 0.2
  %v253 = vmul.f32 %v243, 0.2
  %v254 = vsel %vm246, %v232, %v250
  %v255 = vsel %vm247, %v235, %v251
  %v256 = vsel %vm248, %v240, %v252
  %v257 = vsel %vm249, %v243, %v253
  %v258 = vld [vmem:[%s3] sm:$0xff]
  %v259 = vld [vmem:[%s3 + $0x8] sm:$0xff]
  %v260 = vld [vmem:[%s3 + $0x10] sm:$0xff]
  %v261 = vld [vmem:[%s3 + $0x18] sm:$0xff]
  %263 = vset.pattern.permute.xlu0 0
  %264 = vperm.xlu0 %263, %v258
  %v265 = vpop.permute.xlu0 %264
  %268 = vset.pattern.permute.xlu0 0
  %269 = vperm.xlu0 %268, %v259
  %v270 = vpop.permute.xlu0 %269
  %273 = vset.pattern.permute.xlu0 0
  %274 = vperm.xlu0 %273, %v260
  %v275 = vpop.permute.xlu0 %274
  %278 = vset.pattern.permute.xlu0 0
  %279 = vperm.xlu0 %278, %v261
  %v280 = vpop.permute.xlu0 %279
  %v282 = vmul.f32 %v254, %v265
  %v283 = vmul.f32 %v255, %v270
  %v284 = vmul.f32 %v256, %v275
  %v285 = vmul.f32 %v257, %v280
  %v286 = vld [vmem:[%s4] sm:$0xff]
  %v287 = vld [vmem:[%s4 + $0x8] sm:$0xff]
  %v288 = vld [vmem:[%s4 + $0x10] sm:$0xff]
  %v289 = vld [vmem:[%s4 + $0x18] sm:$0xff]
  %291 = vset.pattern.permute.xlu0 0
  %292 = vperm.xlu0 %291, %v286
  %v293 = vpop.permute.xlu0 %292
  %296 = vset.pattern.permute.xlu0 0
  %297 = vperm.xlu0 %296, %v287
  %v298 = vpop.permute.xlu0 %297
  %301 = vset.pattern.permute.xlu0 0
  %302 = vperm.xlu0 %301, %v288
  %v303 = vpop.permute.xlu0 %302
  %306 = vset.pattern.permute.xlu0 0
  %307 = vperm.xlu0 %306, %v289
  %v308 = vpop.permute.xlu0 %307
  %v310 = vadd.f32 %v282, %v293
  %v311 = vadd.f32 %v283, %v298
  %v312 = vadd.f32 %v284, %v303
  %v313 = vadd.f32 %v285, %v308
  %vm314 = vcmask 261120
  %315 = vst.msk [vmem:[%s5] sm:$0xff] %vm314, %v310
  %316 = vst.msk [vmem:[%s5 + $0x8] sm:$0xff] %vm314, %v311
  %317 = vst.msk [vmem:[%s5 + $0x10] sm:$0xff] %vm314, %v312
  %318 = vst.msk [vmem:[%s5 + $0x18] sm:$0xff] %vm314, %v313
  // Predicated region
  $region22: #{discriminator_forward.8} parent=0 // pred_check
    _
  $region23: #{discriminator_forward.8} parent=0 // pred_check_branch
    %320 = sbr.rel (0) target = $region25
  $region24: #{discriminator_forward.8} parent=0 // pred_region
    _
  $region25: #{discriminator_forward.8} parent=0 // pred_fallthru
    _
  // Predicated region
  $region26: #{discriminator_forward.8} parent=0 // pred_check
    _
  $region27: #{discriminator_forward.8} parent=0 // pred_check_branch
    %322 = sbr.rel (0) target = $region29
  $region28: #{discriminator_forward.8} parent=0 // pred_region
    _
  $region29: #{discriminator_forward.8} parent=0 // pred_fallthru
    _

// kernel: discriminator_forward.9
$region0: #{discriminator_forward.9}
  #allocation0 [shape = 'u32[]', space=smem, size = 0x4, offset = 0x4, fixed_abs, tag = 'smem constant byte address 0x4 - core index']
  #allocation1 [shape = 'u32[144,128]{1,0:T(1,128)}', space=vmem, size = 0x12000, scoped, tag = 'internal scratch']
  %s0 = inlined_call_operand.vmem [shape: bf16[2,512], index: 0, kind: input, shape index: {}]
  %s1 = inlined_call_operand.vmem [shape: bf16[512,256], index: 1, kind: input, shape index: {}]
  %s2 = inlined_call_operand.vmem [shape: f32[1,256], index: 2, kind: input, shape index: {}]
  %s3 = inlined_call_operand.vmem [shape: f32[2,1], index: 3, kind: output, shape index: {0}]
  %s4 = inlined_call_operand.hbm [shape: f32[2,10], index: 4, kind: output, shape index: {1}]
  %5 = xla_tuple %s3, %s4
  %s6 = sld [smem:[#allocation0]]
  $region30: #{discriminator_forward.9} parent=0
    _
  %s8 = ssub.s32 1, %s6
  %s9 = scalar_select 0, %s8, %s6
  $region1: #{discriminator_forward.9} parent=0
    #allocation2 [shape = 'u8[1024]{0}', space=vmem, size = 0x400, scoped, tag = 'output window, operand 1, single buffered']
    #allocation3 [shape = 's32[1]{0}', space=sflag, size = 0x4, scoped, tag = 'scoped memory for discriminator_forward.9']
    %10 = vsyncpa [#allocation3], 0
    // Predicated region
    $region2: #{discriminator_forward.9} parent=1 // pred_check
      _
    $region3: #{discriminator_forward.9} parent=1 // pred_check_branch
      %12 = sbr.rel (0) target = $region5
    $region4: #{discriminator_forward.9} parent=1 // pred_region
      _
    $region5: #{discriminator_forward.9} parent=1 // pred_fallthru
      _
    // Predicated region
    $region6: #{discriminator_forward.9} parent=1 // pred_check
      _
    $region7: #{discriminator_forward.9} parent=1 // pred_check_branch
      %14 = sbr.rel (0) target = $region9
    $region8: #{discriminator_forward.9} parent=1 // pred_region
      _
    $region9: #{discriminator_forward.9} parent=1 // pred_fallthru
      _
    // Predicated region
    $region10: #{discriminator_forward.9} parent=1 // pred_check
      _
    $region11: #{discriminator_forward.9} parent=1 // pred_check_branch
      %16 = sbr.rel (0) target = $region13
    $region12: #{discriminator_forward.9} parent=1 // pred_region
      _
    $region13: #{discriminator_forward.9} parent=1 // pred_fallthru
      _
    %v17 = vld [vmem:[%s0] sm:$0xf]
    %v18 = vld [vmem:[%s1] sm:$0xff]
    %v19 = vld [vmem:[%s1 + $0x8] sm:$0xff]
    %v20 = vld [vmem:[%s1 + $0x10] sm:$0xff]
    %v21 = vld [vmem:[%s1 + $0x18] sm:$0xff]
    %v22 = vld [vmem:[%s1 + $0x20] sm:$0xff]
    %v23 = vld [vmem:[%s1 + $0x28] sm:$0xff]
    %v24 = vld [vmem:[%s1 + $0x30] sm:$0xff]
    %v25 = vld [vmem:[%s1 + $0x38] sm:$0xff]
    %v26 = vld [vmem:[%s1 + $0x40] sm:$0xff]
    %v27 = vld [vmem:[%s1 + $0x48] sm:$0xff]
    %v28 = vld [vmem:[%s1 + $0x50] sm:$0xff]
    %v29 = vld [vmem:[%s1 + $0x58] sm:$0xff]
    %v30 = vld [vmem:[%s1 + $0x60] sm:$0xff]
    %v31 = vld [vmem:[%s1 + $0x68] sm:$0xff]
    %v32 = vld [vmem:[%s1 + $0x70] sm:$0xff]
    %v33 = vld [vmem:[%s1 + $0x78] sm:$0xff]
    %v34 = vld [vmem:[%s1 + $0x80] sm:$0xff]
    %v35 = vld [vmem:[%s1 + $0x88] sm:$0xff]
    %v36 = vld [vmem:[%s1 + $0x90] sm:$0xff]
    %v37 = vld [vmem:[%s1 + $0x98] sm:$0xff]
    %v38 = vld [vmem:[%s1 + $0xa0] sm:$0xff]
    %v39 = vld [vmem:[%s1 + $0xa8] sm:$0xff]
    %v40 = vld [vmem:[%s1 + $0xb0] sm:$0xff]
    %v41 = vld [vmem:[%s1 + $0xb8] sm:$0xff]
    %v42 = vld [vmem:[%s1 + $0xc0] sm:$0xff]
    %v43 = vld [vmem:[%s1 + $0xc8] sm:$0xff]
    %v44 = vld [vmem:[%s1 + $0xd0] sm:$0xff]
    %v45 = vld [vmem:[%s1 + $0xd8] sm:$0xff]
    %v46 = vld [vmem:[%s1 + $0xe0] sm:$0xff]
    %v47 = vld [vmem:[%s1 + $0xe8] sm:$0xff]
    %v48 = vld [vmem:[%s1 + $0xf0] sm:$0xff]
    %v49 = vld [vmem:[%s1 + $0xf8] sm:$0xff]
    %v50 = vld [vmem:[%s1 + $0x100] sm:$0xff]
    %v51 = vld [vmem:[%s1 + $0x108] sm:$0xff]
    %v52 = vld [vmem:[%s1 + $0x110] sm:$0xff]
    %v53 = vld [vmem:[%s1 + $0x118] sm:$0xff]
    %v54 = vld [vmem:[%s1 + $0x120] sm:$0xff]
    %v55 = vld [vmem:[%s1 + $0x128] sm:$0xff]
    %v56 = vld [vmem:[%s1 + $0x130] sm:$0xff]
    %v57 = vld [vmem:[%s1 + $0x138] sm:$0xff]
    %v58 = vld [vmem:[%s1 + $0x140] sm:$0xff]
    %v59 = vld [vmem:[%s1 + $0x148] sm:$0xff]
    %v60 = vld [vmem:[%s1 + $0x150] sm:$0xff]
    %v61 = vld [vmem:[%s1 + $0x158] sm:$0xff]
    %v62 = vld [vmem:[%s1 + $0x160] sm:$0xff]
    %v63 = vld [vmem:[%s1 + $0x168] sm:$0xff]
    %v64 = vld [vmem:[%s1 + $0x170] sm:$0xff]
    %v65 = vld [vmem:[%s1 + $0x178] sm:$0xff]
    %v66 = vld [vmem:[%s1 + $0x180] sm:$0xff]
    %v67 = vld [vmem:[%s1 + $0x188] sm:$0xff]
    %v68 = vld [vmem:[%s1 + $0x190] sm:$0xff]
    %v69 = vld [vmem:[%s1 + $0x198] sm:$0xff]
    %v70 = vld [vmem:[%s1 + $0x1a0] sm:$0xff]
    %v71 = vld [vmem:[%s1 + $0x1a8] sm:$0xff]
    %v72 = vld [vmem:[%s1 + $0x1b0] sm:$0xff]
    %v73 = vld [vmem:[%s1 + $0x1b8] sm:$0xff]
    %v74 = vld [vmem:[%s1 + $0x1c0] sm:$0xff]
    %v75 = vld [vmem:[%s1 + $0x1c8] sm:$0xff]
    %v76 = vld [vmem:[%s1 + $0x1d0] sm:$0xff]
    %v77 = vld [vmem:[%s1 + $0x1d8] sm:$0xff]
    %v78 = vld [vmem:[%s1 + $0x1e0] sm:$0xff]
    %v79 = vld [vmem:[%s1 + $0x1e8] sm:$0xff]
    %v80 = vld [vmem:[%s1 + $0x1f0] sm:$0xff]
    %v81 = vld [vmem:[%s1 + $0x1f8] sm:$0xff]
    %v82 = vld [vmem:[%s2] sm:$0x3]
    %v84 = vlaneseq
    %v85 = vshrl.u32 %v84, 7
    %v86 = vsub.s32 0, %v85
    %v87 = vrot.slane %v82, %v86
    %v88 = vlaneseq
    %v89 = vshrl.u32 %v88, 7
    %v90 = vsub.s32 1, %v89
    %v91 = vrot.slane %v82, %v90
    %v96 = vunpack.c.l.s4 1966171168
    %v97 = vunpack.c.0.s8 %v96
    %v98 = vlaneseq
    %v99 = vshrl.u32 %v98, 7
    %v100 = vsub.s32 %v97, %v99
    %v101 = vrot.slane %v17, %v100
    %v102 = vcombine.high %v101, %v101
    %v104 = vunpack.c.l.s4 1966171168
    %v105 = vunpack.c.0.s8 %v104
    %v106 = vlaneseq
    %v107 = vshrl.u32 %v106, 7
    %v108 = vsub.s32 %v105, %v107
    %v109 = vrot.slane %v101, %v108
    %v111 = vunpack.c.l.s4 1966171168
    %v112 = vunpack.c.0.s8 %v111
    %v113 = vlaneseq
    %v114 = vshrl.u32 %v113, 7
    %v115 = vsub.s32 %v112, %v114
    %v116 = vrot.slane %v102, %v115
    %v117 = vcombine.high %v109, %v109
    %v118 = vcombine.high %v116, %v116
    %v187 = vunpack.c.l.b16 %v18
    %v188 = vunpack.c.h.b16 %v18
    %v189 = vunpack.c.l.b16 %v19
    %v190 = vunpack.c.h.b16 %v19
    %v191 = vunpack.c.l.b16 %v20
    %v192 = vunpack.c.h.b16 %v20
    %v193 = vunpack.c.l.b16 %v21
    %v194 = vunpack.c.h.b16 %v21
    %v195 = vunpack.c.l.b16 %v22
    %v196 = vunpack.c.h.b16 %v22
    %v197 = vunpack.c.l.b16 %v23
    %v198 = vunpack.c.h.b16 %v23
    %v199 = vunpack.c.l.b16 %v24
    %v200 = vunpack.c.h.b16 %v24
    %v201 = vunpack.c.l.b16 %v25
    %v202 = vunpack.c.h.b16 %v25
    %v203 = vunpack.c.l.b16 %v26
    %v204 = vunpack.c.h.b16 %v26
    %v205 = vunpack.c.l.b16 %v27
    %v206 = vunpack.c.h.b16 %v27
    %v207 = vunpack.c.l.b16 %v28
    %v208 = vunpack.c.h.b16 %v28
    %v209 = vunpack.c.l.b16 %v29
    %v210 = vunpack.c.h.b16 %v29
    %v211 = vunpack.c.l.b16 %v30
    %v212 = vunpack.c.h.b16 %v30
    %v213 = vunpack.c.l.b16 %v31
    %v214 = vunpack.c.h.b16 %v31
    %v215 = vunpack.c.l.b16 %v32
    %v216 = vunpack.c.h.b16 %v32
    %v217 = vunpack.c.l.b16 %v33
    %v218 = vunpack.c.h.b16 %v33
    %v219 = vunpack.c.l.b16 %v34
    %v220 = vunpack.c.h.b16 %v34
    %v221 = vunpack.c.l.b16 %v35
    %v222 = vunpack.c.h.b16 %v35
    %v223 = vunpack.c.l.b16 %v36
    %v224 = vunpack.c.h.b16 %v36
    %v225 = vunpack.c.l.b16 %v37
    %v226 = vunpack.c.h.b16 %v37
    %v227 = vunpack.c.l.b16 %v38
    %v228 = vunpack.c.h.b16 %v38
    %v229 = vunpack.c.l.b16 %v39
    %v230 = vunpack.c.h.b16 %v39
    %v231 = vunpack.c.l.b16 %v40
    %v232 = vunpack.c.h.b16 %v40
    %v233 = vunpack.c.l.b16 %v41
    %v234 = vunpack.c.h.b16 %v41
    %v235 = vunpack.c.l.b16 %v42
    %v236 = vunpack.c.h.b16 %v42
    %v237 = vunpack.c.l.b16 %v43
    %v238 = vunpack.c.h.b16 %v43
    %v239 = vunpack.c.l.b16 %v44
    %v240 = vunpack.c.h.b16 %v44
    %v241 = vunpack.c.l.b16 %v45
    %v242 = vunpack.c.h.b16 %v45
    %v243 = vunpack.c.l.b16 %v46
    %v244 = vunpack.c.h.b16 %v46
    %v245 = vunpack.c.l.b16 %v47
    %v246 = vunpack.c.h.b16 %v47
    %v247 = vunpack.c.l.b16 %v48
    %v248 = vunpack.c.h.b16 %v48
    %v249 = vunpack.c.l.b16 %v49
    %v250 = vunpack.c.h.b16 %v49
    %v251 = vunpack.c.l.b16 %v50
    %v252 = vunpack.c.h.b16 %v50
    %v253 = vunpack.c.l.b16 %v51
    %v254 = vunpack.c.h.b16 %v51
    %v255 = vunpack.c.l.b16 %v52
    %v256 = vunpack.c.h.b16 %v52
    %v257 = vunpack.c.l.b16 %v53
    %v258 = vunpack.c.h.b16 %v53
    %v259 = vunpack.c.l.b16 %v54
    %v260 = vunpack.c.h.b16 %v54
    %v261 = vunpack.c.l.b16 %v55
    %v262 = vunpack.c.h.b16 %v55
    %v263 = vunpack.c.l.b16 %v56
    %v264 = vunpack.c.h.b16 %v56
    %v265 = vunpack.c.l.b16 %v57
    %v266 = vunpack.c.h.b16 %v57
    %v267 = vunpack.c.l.b16 %v58
    %v268 = vunpack.c.h.b16 %v58
    %v269 = vunpack.c.l.b16 %v59
    %v270 = vunpack.c.h.b16 %v59
    %v271 = vunpack.c.l.b16 %v60
    %v272 = vunpack.c.h.b16 %v60
    %v273 = vunpack.c.l.b16 %v61
    %v274 = vunpack.c.h.b16 %v61
    %v275 = vunpack.c.l.b16 %v62
    %v276 = vunpack.c.h.b16 %v62
    %v277 = vunpack.c.l.b16 %v63
    %v278 = vunpack.c.h.b16 %v63
    %v279 = vunpack.c.l.b16 %v64
    %v280 = vunpack.c.h.b16 %v64
    %v281 = vunpack.c.l.b16 %v65
    %v282 = vunpack.c.h.b16 %v65
    %v283 = vunpack.c.l.b16 %v66
    %v284 = vunpack.c.h.b16 %v66
    %v285 = vunpack.c.l.b16 %v67
    %v286 = vunpack.c.h.b16 %v67
    %v287 = vunpack.c.l.b16 %v68
    %v288 = vunpack.c.h.b16 %v68
    %v289 = vunpack.c.l.b16 %v69
    %v290 = vunpack.c.h.b16 %v69
    %v291 = vunpack.c.l.b16 %v70
    %v292 = vunpack.c.h.b16 %v70
    %v293 = vunpack.c.l.b16 %v71
    %v294 = vunpack.c.h.b16 %v71
    %v295 = vunpack.c.l.b16 %v72
    %v296 = vunpack.c.h.b16 %v72
    %v297 = vunpack.c.l.b16 %v73
    %v298 = vunpack.c.h.b16 %v73
    %v299 = vunpack.c.l.b16 %v74
    %v300 = vunpack.c.h.b16 %v74
    %v301 = vunpack.c.l.b16 %v75
    %v302 = vunpack.c.h.b16 %v75
    %v303 = vunpack.c.l.b16 %v76
    %v304 = vunpack.c.h.b16 %v76
    %v305 = vunpack.c.l.b16 %v77
    %v306 = vunpack.c.h.b16 %v77
    %v307 = vunpack.c.l.b16 %v78
    %v308 = vunpack.c.h.b16 %v78
    %v309 = vunpack.c.l.b16 %v79
    %v310 = vunpack.c.h.b16 %v79
    %v311 = vunpack.c.l.b16 %v80
    %v312 = vunpack.c.h.b16 %v80
    %v313 = vunpack.c.l.b16 %v81
    %v314 = vunpack.c.h.b16 %v81
    %v315 = vpack.c.b16 %v189, %v187
    %v316 = vpack.c.b16 %v190, %v188
    %v317 = vpack.c.b16 %v193, %v191
    %v318 = vpack.c.b16 %v194, %v192
    %v319 = vpack.c.b16 %v197, %v195
    %v320 = vpack.c.b16 %v198, %v196
    %v321 = vpack.c.b16 %v201, %v199
    %v322 = vpack.c.b16 %v202, %v200
    %v323 = vpack.c.b16 %v205, %v203
    %v324 = vpack.c.b16 %v206, %v204
    %v325 = vpack.c.b16 %v209, %v207
    %v326 = vpack.c.b16 %v210, %v208
    %v327 = vpack.c.b16 %v213, %v211
    %v328 = vpack.c.b16 %v214, %v212
    %v329 = vpack.c.b16 %v217, %v215
    %v330 = vpack.c.b16 %v218, %v216
    %v331 = vpack.c.b16 %v221, %v219
    %v332 = vpack.c.b16 %v222, %v220
    %v333 = vpack.c.b16 %v225, %v223
    %v334 = vpack.c.b16 %v226, %v224
    %v335 = vpack.c.b16 %v229, %v227
    %v336 = vpack.c.b16 %v230, %v228
    %v337 = vpack.c.b16 %v233, %v231
    %v338 = vpack.c.b16 %v234, %v232
    %v339 = vpack.c.b16 %v237, %v235
    %v340 = vpack.c.b16 %v238, %v236
    %v341 = vpack.c.b16 %v241, %v239
    %v342 = vpack.c.b16 %v242, %v240
    %v343 = vpack.c.b16 %v245, %v243
    %v344 = vpack.c.b16 %v246, %v244
    %v345 = vpack.c.b16 %v249, %v247
    %v346 = vpack.c.b16 %v250, %v248
    %v347 = vpack.c.b16 %v253, %v251
    %v348 = vpack.c.b16 %v254, %v252
    %v349 = vpack.c.b16 %v257, %v255
    %v350 = vpack.c.b16 %v258, %v256
    %v351 = vpack.c.b16 %v261, %v259
    %v352 = vpack.c.b16 %v262, %v260
    %v353 = vpack.c.b16 %v265, %v263
    %v354 = vpack.c.b16 %v266, %v264
    %v355 = vpack.c.b16 %v269, %v267
    %v356 = vpack.c.b16 %v270, %v268
    %v357 = vpack.c.b16 %v273, %v271
    %v358 = vpack.c.b16 %v274, %v272
    %v359 = vpack.c.b16 %v277, %v275
    %v360 = vpack.c.b16 %v278, %v276
    %v361 = vpack.c.b16 %v281, %v279
    %v362 = vpack.c.b16 %v282, %v280
    %v363 = vpack.c.b16 %v285, %v283
    %v364 = vpack.c.b16 %v286, %v284
    %v365 = vpack.c.b16 %v289, %v287
    %v366 = vpack.c.b16 %v290, %v288
    %v367 = vpack.c.b16 %v293, %v291
    %v368 = vpack.c.b16 %v294, %v292
    %v369 = vpack.c.b16 %v297, %v295
    %v370 = vpack.c.b16 %v298, %v296
    %v371 = vpack.c.b16 %v301, %v299
    %v372 = vpack.c.b16 %v302, %v300
    %v373 = vpack.c.b16 %v305, %v303
    %v374 = vpack.c.b16 %v306, %v304
    %v375 = vpack.c.b16 %v309, %v307
    %v376 = vpack.c.b16 %v310, %v308
    %v377 = vpack.c.b16 %v313, %v311
    %v378 = vpack.c.b16 %v314, %v312
    %443 = vmatprep.subr.bf16.mxu0 %v316
    %444 = vmatpush1.bf16.msra.mxu0 %v315
    %445 = vmatprep.subr.bf16.mxu0 %v318
    %446 = vmatpush1.bf16.msra.mxu0 %v317
    %447 = vmatprep.subr.bf16.mxu0 %v320
    %448 = vmatpush1.bf16.msra.mxu0 %v319
    %449 = vmatprep.subr.bf16.mxu0 %v322
    %450 = vmatpush1.bf16.msra.mxu0 %v321
    %451 = vmatprep.subr.bf16.mxu0 %v324
    %452 = vmatpush1.bf16.msra.mxu0 %v323
    %453 = vmatprep.subr.bf16.mxu0 %v326
    %454 = vmatpush1.bf16.msra.mxu0 %v325
    %455 = vmatprep.subr.bf16.mxu0 %v328
    %456 = vmatpush1.bf16.msra.mxu0 %v327
    %457 = vmatprep.subr.bf16.mxu0 %v330
    %458 = vmatpush1.bf16.msra.mxu0 %v329
    %459 = vmatprep.subr.bf16.mxu0 %v332
    %460 = vmatpush1.bf16.msra.mxu0 %v331
    %461 = vmatprep.subr.bf16.mxu0 %v334
    %462 = vmatpush1.bf16.msra.mxu0 %v333
    %463 = vmatprep.subr.bf16.mxu0 %v336
    %464 = vmatpush1.bf16.msra.mxu0 %v335
    %465 = vmatprep.subr.bf16.mxu0 %v338
    %466 = vmatpush1.bf16.msra.mxu0 %v337
    %467 = vmatprep.subr.bf16.mxu0 %v340
    %468 = vmatpush1.bf16.msra.mxu0 %v339
    %469 = vmatprep.subr.bf16.mxu0 %v342
    %470 = vmatpush1.bf16.msra.mxu0 %v341
    %471 = vmatprep.subr.bf16.mxu0 %v344
    %472 = vmatpush1.bf16.msra.mxu0 %v343
    %473 = vmatprep.subr.bf16.mxu0 %v346
    %474 = vmatpush1.bf16.msra.mxu0 %v345
    %475 = vmatprep.mubr.bf16.mxu0 %v116
    %476 = vmatmul.mubr.bf16.gmra.mrb[0].mxu0 %v109
    %v477 = vpop.f32.mrb[0].mxu0
    %v478 = vadd.f32 %v87, %v477
    %v479 = vpop.f32.mrb[0].mxu0
    %v480 = vadd.f32 %v91, %v479
    %v481 = vpop.f32.mrb[0].mxu0
    %v482 = vpop.f32.mrb[0].mxu0
    %483 = vdwg.mxu0
    %484 = vmatprep.subr.bf16.mxu0 %v348
    %485 = vmatpush1.bf16.msra.mxu0 %v347
    %486 = vmatprep.subr.bf16.mxu0 %v350
    %487 = vmatpush1.bf16.msra.mxu0 %v349
    %488 = vmatprep.subr.bf16.mxu0 %v352
    %489 = vmatpush1.bf16.msra.mxu0 %v351
    %490 = vmatprep.subr.bf16.mxu0 %v354
    %491 = vmatpush1.bf16.msra.mxu0 %v353
    %492 = vmatprep.subr.bf16.mxu0 %v356
    %493 = vmatpush1.bf16.msra.mxu0 %v355
    %494 = vmatprep.subr.bf16.mxu0 %v358
    %495 = vmatpush1.bf16.msra.mxu0 %v357
    %496 = vmatprep.subr.bf16.mxu0 %v360
    %497 = vmatpush1.bf16.msra.mxu0 %v359
    %498 = vmatprep.subr.bf16.mxu0 %v362
    %499 = vmatpush1.bf16.msra.mxu0 %v361
    %500 = vmatprep.subr.bf16.mxu0 %v364
    %501 = vmatpush1.bf16.msra.mxu0 %v363
    %502 = vmatprep.subr.bf16.mxu0 %v366
    %503 = vmatpush1.bf16.msra.mxu0 %v365
    %504 = vmatprep.subr.bf16.mxu0 %v368
    %505 = vmatpush1.bf16.msra.mxu0 %v367
    %506 = vmatprep.subr.bf16.mxu0 %v370
    %507 = vmatpush1.bf16.msra.mxu0 %v369
    %508 = vmatprep.subr.bf16.mxu0 %v372
    %509 = vmatpush1.bf16.msra.mxu0 %v371
    %510 = vmatprep.subr.bf16.mxu0 %v374
    %511 = vmatpush1.bf16.msra.mxu0 %v373
    %512 = vmatprep.subr.bf16.mxu0 %v376
    %513 = vmatpush1.bf16.msra.mxu0 %v375
    %514 = vmatprep.subr.bf16.mxu0 %v378
    %515 = vmatpush1.bf16.msra.mxu0 %v377
    %516 = vmatprep.mubr.bf16.mxu0 %v118
    %517 = vmatmul.mubr.bf16.gmra.mrb[0].mxu0 %v117
    %v518 = vpop.f32.mrb[0].mxu0
    %v519 = vadd.f32 %v478, %v518
    %v520 = vpop.f32.mrb[0].mxu0
    %v521 = vadd.f32 %v480, %v520
    %v522 = vpop.f32.mrb[0].mxu0
    %v523 = vpop.f32.mrb[0].mxu0
    %524 = vdwg.mxu0
    %vm525 = vcmask 74752
    %v526 = vsel %vm525, %v519, -inf
    %527 = vmax.xlane.f32.xlu0 %v526
    %v528 = vpop.xlane.xlu0 %527
    %v529 = vsub.f32 %v519, %v528
    %v530 = vmul.f32 %v529, 1.442695
    %v531 = vpow.pop %v530
    %v532 = vsel %vm525, %v531, 0.0
    %533 = vadd.xlane.f32.xlu0 %v532
    %v534 = vpop.xlane.xlu0 %533
    %v535 = vrcp.pop %v534
    %v536 = vmul.f32 %v531, %v535
    %537 = vst.msk [vmem:[#allocation2] sm:$0x3] %vm525, %v536
    %v538 = vand.u32 2147483647, %v521
    %v539 = vsub.f32 0.0, %v538
    %v540 = vmul.f32 %v539, 1.442695
    %v541 = vpow.pop %v540
    %v542 = vadd.f32 %v541, 1.0
    %v543 = vrcp.pop %v542
    %v544 = vmul.f32 1.0, %v543
    %vm545 = vcmp.ge.f32.partialorder %v521, 0.0
    %v546 = vsub.f32 1.0, %v544
    %v547 = vsel %vm545, %v544, %v546
    %vm548 = vcmask 1024
    %549 = vst.msk [vmem:[%s3] sm:$0x3] %vm548, %v547
    // Predicated region
    $region14: #{discriminator_forward.9} parent=1 // pred_check
      _
    $region15: #{discriminator_forward.9} parent=1 // pred_check_branch
      %551 = sbr.rel (0) target = $region17
    $region16: #{discriminator_forward.9} parent=1 // pred_region
      _
    $region17: #{discriminator_forward.9} parent=1 // pred_fallthru
      _
    // Predicated region
    $region18: #{discriminator_forward.9} parent=1 // pred_check
      _
    $region19: #{discriminator_forward.9} parent=1 // pred_check_branch
      %553 = sbr.rel (0) target = $region21
    $region20: #{discriminator_forward.9} parent=1 // pred_region
      %s555 = ssub.s32 32, 32
      %556 = vsyncadd [#allocation3], %s555
      %s558 = sshll.u32 [#allocation2], 4
      %s559 = int_to_ptr.vmem [resolvable:$true] %s558
      %561 = dma.vmem_to_hbm [thread:$0]  %s559, 32, %s4, [#allocation3]
    $region21: #{discriminator_forward.9} parent=1 // pred_fallthru
      _
    // Predicated region
    $region22: #{discriminator_forward.9} parent=1 // pred_check
      _
    $region23: #{discriminator_forward.9} parent=1 // pred_check_branch
      %563 = sbr.rel (0) target = $region25
    $region24: #{discriminator_forward.9} parent=1 // pred_region
      _
    $region25: #{discriminator_forward.9} parent=1 // pred_fallthru
      _
    // Predicated region
    $region26: #{discriminator_forward.9} parent=1 // pred_check
      _
    $region27: #{discriminator_forward.9} parent=1 // pred_check_branch
      %565 = sbr.rel (0) target = $region29
    $region28: #{discriminator_forward.9} parent=1 // pred_region
      %566 = dma.done [#allocation3], 32
    $region29: #{discriminator_forward.9} parent=1 // pred_fallthru
      _
    %567 = vsyncpa [#allocation3], 1

</llo_original>
